<compile_context>
chip_gen: v6e
topology: v6e:2x2x1
jax: 0.10.0
libtpu: 0.0.40
codegen_flags: <defaults>
</compile_context>

<pallas_src>
import numpy as np
import jax
import jax.numpy as jnp
from jax import lax
from jax.experimental import pallas as pl
from jax.experimental.pallas import tpu as pltpu


def _cdiv(a, b):
    return -(-a // b)


def _round_up(a, b):
    return _cdiv(a, b) * b


# ---------------------------------------------------------------------------
# Host-side static helpers (run once at build time)
# ---------------------------------------------------------------------------
def _bilinear_up2x_matrix(n):
    """(2n, n) interpolation matrix == nn.Upsample(scale=2, 'bilinear'),
    align_corners=False (half-pixel centers, PyTorch clamping)."""
    m = np.zeros((2 * n, n), np.float32)
    for o in range(2 * n):
        src = max((o + 0.5) * 0.5 - 0.5, 0.0)
        lo = int(np.floor(src))
        hi = min(lo + 1, n - 1)
        frac = src - lo
        m[o, lo] += 1.0 - frac
        m[o, hi] += frac
    return m


def _tap_masks(H, W):
    """(6, 1, H*W) f32 validity masks, only for the 6 taps with dw != 0
    (the dw == 0 taps read the zeroed halo and never row-wrap)."""
    p = np.arange(H * W)
    h, w = p // W, p % W
    ms = []
    for k in range(9):
        dh, dw = k // 3 - 1, k % 3 - 1
        if dw == 0:
            continue
        valid = (h + dh >= 0) & (h + dh < H) & (w + dw >= 0) & (w + dw < W)
        ms.append(valid.astype(np.float32)[None, :])
    return np.stack(ms, axis=0)


def _pack_weights(w_oihw, cmax):
    """(Cout, Cin, 3, 3) -> bf16 (Cout, 9*cmax); row index = k*cmax + ci with
    k = 3*kh + kw.  Columns for ci >= Cin are zero, so unused scratch channel
    rows contribute nothing to the matmul."""
    cout, cin, _, _ = w_oihw.shape
    wt = jnp.transpose(w_oihw, (0, 2, 3, 1)).reshape(cout, 9, cin)
    wt = jnp.pad(wt, ((0, 0), (0, 0), (0, cmax - cin)))
    return wt.reshape(cout, 9 * cmax).astype(jnp.bfloat16)


# ---------------------------------------------------------------------------
# Fused kernel
# ---------------------------------------------------------------------------
def _make_kernel(cfg):
    do_up = cfg["do_upsample"]
    W = cfg["W"]
    N = cfg["N"]
    CMAX = cfg["CMAX"]
    P = cfg["PADL"]
    Bt = cfg["Bt"]
    nlayers = cfg["nlayers"]
    SLAB = N + 2 * P                      # per-image lane stride in the halo scratch

    # (lane shift, mask index or None) for the 9 taps, in weight-pack order.
    taps = []
    mi = 0
    for k in range(9):
        dh, dw = k // 3 - 1, k % 3 - 1
        if dw != 0:
            taps.append((dh * W + dw, mi))
            mi += 1
        else:
            taps.append((dh * W + dw, None))

    def kernel(*refs):
        pos = 0
        x_ref = refs[pos]; pos += 1
        if do_up:
            y_ref = refs[pos]; up_ref = refs[pos + 1]; pos += 2
        mask_ref = refs[pos]; pos += 1
        wb = refs[pos:pos + 2 * nlayers]; pos += 2 * nlayers
        o_ref = refs[pos]
        xpad_ref = refs[pos + 1]          # (CMAX, Bt*SLAB) f32 halo scratch
        patch_ref = refs[pos + 2]         # (9*CMAX, Bt*N) bf16 im2col scratch

        # Zero ONLY the halo lane bands, once per grid step.  Scratch persists
        # across steps and is undefined on the first one; this must NOT be
        # gated on program_id == 0 (unsafe under the megacore parallel split).
        halo_zeros = jnp.zeros((CMAX, P), jnp.float32)
        for b in range(Bt):
            off = b * SLAB
            xpad_ref[:, off:off + P] = halo_zeros
            xpad_ref[:, off + P + N:off + SLAB] = halo_zeros

        def stage(vals):
            # One aligned, full-CMAX-row store per image; zero-padding the
            # unused channel rows guarantees no stale VMEM is ever read.
            for b in range(Bt):
                v = vals[b]
                if v.shape[0] < CMAX:
                    v = jnp.concatenate(
                        [v, jnp.zeros((CMAX - v.shape[0], N), jnp.float32)],
                        axis=0)
                off = b * SLAB
                xpad_ref[:, off + P:off + P + N] = v

        def conv_relu(layer_idx):
            # im2col in bf16: 9 lane-shifted windows per image; only the six
            # dw != 0 taps need the 0/1 edge mask.
            for k, (d, m_idx) in enumerate(taps):
                for b in range(Bt):
                    base = b * SLAB + P + d
                    shifted = xpad_ref[:, base:base + N]
                    if m_idx is not None:
                        shifted = shifted * mask_ref[m_idx]
                    patch_ref[k * CMAX:(k + 1) * CMAX, b * N:(b + 1) * N] = (
                        shifted.astype(jnp.bfloat16))
            w_ref, b_ref = wb[2 * layer_idx], wb[2 * layer_idx + 1]
            # One flipped matmul per layer: (Cout, 9*CMAX) @ (9*CMAX, Bt*N),
            # bf16 MXU operands, f32 accumulation; bias + ReLU stay f32.
            acc = jnp.dot(w_ref[...], patch_ref[...],
                          preferred_element_type=jnp.float32)
            return jnp.maximum(acc + b_ref[...], 0.0)       # (Cout, Bt*N) f32

        # Layer-0 input: (optional) bilinear 2x upsample via one matmul with
        # kron(Uh, Uw)^T, then channel concat as a register-level concatenate
        # so the staging store starts at row 0 (sublane-tile aligned).
        if do_up:
            vals = []
            for b in range(Bt):
                x_up = jnp.dot(x_ref[b].astype(jnp.bfloat16), up_ref[...],
                               preferred_element_type=jnp.float32)   # (cin0, N)
                vals.append(jnp.concatenate([x_up, y_ref[b]], axis=0))
        else:
            vals = [x_ref[b] for b in range(Bt)]
        stage(vals)

        cur = None
        for li in range(nlayers):
            if li > 0:
                stage([cur[:, b * N:(b + 1) * N] for b in range(Bt)])
            cur = conv_relu(li)
        for b in range(Bt):
            o_ref[b] = cur[:, b * N:(b + 1) * N]

    return kernel


def build_fused_forward(params, do_upsample, x_shape, y_shape=None):
    """params: list of (w_oihw, b) jnp arrays.  Returns fn(x, y) -> NCHW out."""
    B, cin0, Hx, Wx = x_shape
    if do_upsample:
        H, W = 2 * Hx, 2 * Wx
        assert y_shape == (B, cin0, H, W), (y_shape, (B, cin0, H, W))
    else:
        H, W = Hx, Wx
    N, Nx = H * W, Hx * Wx

    # Halo width must cover the max tap shift (W + 1); keep it a multiple of
    # 128 so per-image data regions start on a lane-tile boundary.
    PADL = _round_up(W + 1, 128)
    assert PADL >= W + 1

    cins = [int(w.shape[1]) for (w, _) in params]
    couts = [int(w.shape[0]) for (w, _) in params]
    CMAX = _round_up(max(cins), 8)
    nlayers = len(params)
    cout_last = couts[-1]

    # Batch folding: pack Bt images onto the lane axis (target >= 1024 lanes
    # per step) while keeping >= 2 grid steps when B >= 2 (v7x megacore).
    Bt = max(1, min(_cdiv(1024, N), _cdiv(B, 2)))
    num_steps = _cdiv(B, Bt)
    B_pad = num_steps * Bt

    masks = jnp.asarray(_tap_masks(H, W))                         # (6, 1, N) f32
    n_masked = int(masks.shape[0])
    w2ds = [_pack_weights(w, CMAX) for (w, _) in params]          # bf16
    b2ds = [b.reshape(-1, 1).astype(jnp.float32) for (_, b) in params]
    if do_upsample:
        uh = _bilinear_up2x_matrix(Hx)                            # (H, Hx)
        uw = _bilinear_up2x_matrix(Wx)                            # (W, Wx)
        upmat = jnp.asarray(np.kron(uh, uw).T).astype(jnp.bfloat16)  # (Nx, N)

    cfg = dict(do_upsample=do_upsample, W=W, N=N, CMAX=CMAX, PADL=PADL,
               Bt=Bt, nlayers=nlayers)
    kernel = _make_kernel(cfg)

    in_specs = [pl.BlockSpec((Bt, cin0, Nx), lambda i: (i, 0, 0))]
    if do_upsample:
        in_specs.append(pl.BlockSpec((Bt, cin0, N), lambda i: (i, 0, 0)))
        in_specs.append(pl.BlockSpec((Nx, N), lambda i: (0, 0)))
    in_specs.append(pl.BlockSpec((n_masked, 1, N), lambda i: (0, 0, 0)))
    for w2, b2 in zip(w2ds, b2ds):
        in_specs.append(pl.BlockSpec(w2.shape, lambda i: (0, 0)))
        in_specs.append(pl.BlockSpec(b2.shape, lambda i: (0, 0)))

    call = pl.pallas_call(
        kernel,
        out_shape=jax.ShapeDtypeStruct((B_pad, cout_last, N), jnp.float32),
        grid=(num_steps,),
        in_specs=in_specs,
        out_specs=pl.BlockSpec((Bt, cout_last, N), lambda i: (i, 0, 0)),
        scratch_shapes=[
            pltpu.VMEM((CMAX, Bt * (N + 2 * PADL)), jnp.float32),  # halo input
            pltpu.VMEM((9 * CMAX, Bt * N), jnp.bfloat16),          # im2col patches
        ],
        compiler_params=pltpu.CompilerParams(
            dimension_semantics=("parallel",),
            vmem_limit_bytes=32 * 1024 * 1024),
    )

    def fn(x, y=None):
        x_flat = x.reshape(B, cin0, Nx).astype(jnp.float32)
        if B_pad != B:
            x_flat = jnp.pad(x_flat, ((0, B_pad - B), (0, 0), (0, 0)))
        args = [x_flat]
        if do_upsample:
            y_flat = y.reshape(B, cin0, N).astype(jnp.float32)
            if B_pad != B:
                y_flat = jnp.pad(y_flat, ((0, B_pad - B), (0, 0), (0, 0)))
            args += [y_flat, upmat]
        args.append(masks)
        for w2, b2 in zip(w2ds, b2ds):
            args += [w2, b2]
        out = call(*args)
        return out[:B].reshape(B, cout_last, H, W)                # already NCHW

    return fn


# ---------------------------------------------------------------------------
# Parameter construction (same conv shapes as the PyTorch module, OIHW)
# ---------------------------------------------------------------------------
def init_upsample_params(key, in_channels, out_channels, layers, upsample):
    assert layers >= 1
    params = []
    for i in range(layers):
        if i == 0:
            cin = 2 * in_channels if upsample else in_channels
        elif i == 1:
            cin = in_channels
        else:
            cin = out_channels
        cout = in_channels if (i == 0 and layers > 1) else out_channels
        key, kw, kb = jax.random.split(key, 3)
        fan_in = cin * 9
        w = jax.random.normal(kw, (cout, cin, 3, 3), jnp.float32) / jnp.sqrt(fan_in)
        b = 0.01 * jax.random.normal(kb, (cout,), jnp.float32)
        params.append((w, b))
    return params


# ---------------------------------------------------------------------------
# Pure-JAX reference (for correctness check)
# ---------------------------------------------------------------------------
def _up1d_2x_ref(a, axis):
    n = a.shape[axis]
    idx = jnp.arange(2 * n, dtype=jnp.float32)
    src = jnp.maximum((idx + 0.5) / 2.0 - 0.5, 0.0)
    lo = jnp.floor(src).astype(jnp.int32)
    hi = jnp.minimum(lo + 1, n - 1)
    frac = src - lo.astype(jnp.float32)
    a_lo = jnp.take(a, lo, axis=axis)
    a_hi = jnp.take(a, hi, axis=axis)
    shape = [1] * a.ndim
    shape[axis] = 2 * n
    frac = frac.reshape(shape)
    return a_lo * (1.0 - frac) + a_hi * frac


def reference_forward(x, y, params, do_upsample):
    if do_upsample:
        x = _up1d_2x_ref(_up1d_2x_ref(x, 2), 3)
        x = jnp.concatenate([x, y], axis=1)
    for w, b in params:
        x = lax.conv_general_dilated(
            x, w, (1, 1), ((1, 1), (1, 1)),
            dimension_numbers=("NCHW", "OIHW", "NCHW"),
            precision=lax.Precision.HIGHEST)
        x = jnp.maximum(x + b[None, :, None, None], 0.0)
    return x


# ---------------------------------------------------------------------------
if __name__ == "__main__":
    in_channels, out_channels, layers, do_upsample = 4, 8, 2, True
    B, Hs, Ws = 2, 8, 8
    H, W = 2 * Hs, 2 * Ws

    key = jax.random.PRNGKey(0)
    kx, ky, kp = jax.random.split(key, 3)
    x = jax.random.normal(kx, (B, in_channels, Hs, Ws), jnp.float32)   # NCHW
    y = jax.random.normal(ky, (B, in_channels, H, W), jnp.float32)     # NCHW
    params = init_upsample_params(kp, in_channels, out_channels, layers, do_upsample)

    fwd = jax.jit(build_fused_forward(params, do_upsample, x.shape, y.shape))
    out = fwd(x, y)
    jax.block_until_ready(out)

    ref = reference_forward(x, y, params, do_upsample)
    assert out.shape == (B, out_channels, H, W), out.shape
    assert out.dtype == jnp.float32
    assert bool(jnp.all(out >= 0.0))                         # ReLU output
    max_err = float(jnp.max(jnp.abs(out - ref)))
    # bf16 MXU operands with f32 accumulation: expected max abs err ~1e-2.
    assert max_err < 3e-2, f"mismatch vs reference: max abs err {max_err}"
    print("KERNEL_OK")
</pallas_src>

<mosaic_0001>
module attributes {stable_mosaic.version = 11 : i64} {
  func.func @kernel(%arg0: i32, %arg1: memref<1x4x64xf32, #tpu.memory_space<vmem>>, %arg2: memref<1x4x256xf32, #tpu.memory_space<vmem>>, %arg3: memref<64x256xbf16, #tpu.memory_space<vmem>>, %arg4: memref<6x1x256xf32, #tpu.memory_space<vmem>>, %arg5: memref<4x72xbf16, #tpu.memory_space<vmem>>, %arg6: memref<4x1xf32, #tpu.memory_space<vmem>>, %arg7: memref<8x72xbf16, #tpu.memory_space<vmem>>, %arg8: memref<8x1xf32, #tpu.memory_space<vmem>>, %arg9: memref<1x8x256xf32, #tpu.memory_space<vmem>>, %arg10: memref<8x512xf32, #tpu.memory_space<vmem>>, %arg11: memref<72x256xbf16, #tpu.memory_space<vmem>>) attributes {dimension_semantics = [#tpu.dimension_semantics<parallel>], iteration_bounds = array<i64: 2>, scalar_prefetch = 0 : i64, scratch_operands = 2 : i64, tpu.core_type = #tpu.core_type<tc>, window_params = [{transform_indices = @transform_0, window_bounds = array<i64: 1, 4, 64>}, {transform_indices = @transform_1, window_bounds = array<i64: 1, 4, 256>}, {pipeline_mode = #tpu.pipeline_mode<synchronous>, transform_indices = @transform_2, window_bounds = array<i64: 64, 256>}, {pipeline_mode = #tpu.pipeline_mode<synchronous>, transform_indices = @transform_3, window_bounds = array<i64: 6, 1, 256>}, {pipeline_mode = #tpu.pipeline_mode<synchronous>, transform_indices = @transform_4, window_bounds = array<i64: 4, 72>}, {pipeline_mode = #tpu.pipeline_mode<synchronous>, transform_indices = @transform_5, window_bounds = array<i64: 4, 1>}, {pipeline_mode = #tpu.pipeline_mode<synchronous>, transform_indices = @transform_6, window_bounds = array<i64: 8, 72>}, {pipeline_mode = #tpu.pipeline_mode<synchronous>, transform_indices = @transform_7, window_bounds = array<i64: 8, 1>}, {transform_indices = @transform_8, window_bounds = array<i64: 1, 8, 256>}]} {
    %cst = arith.constant 0.000000e+00 : f32
    %0 = vector.broadcast %cst : f32 to vector<8x128xf32>
    %c0 = arith.constant 0 : index
    %c0_0 = arith.constant 0 : index
    %1 = vector.load %arg10[%c0, %c0_0] : memref<8x512xf32, #tpu.memory_space<vmem>>, vector<8x128xf32>
    tpu.vector_store %arg10[%c0, %c0_0], %0 {strides = array<i32>} : memref<8x512xf32, #tpu.memory_space<vmem>>, vector<8x128xf32>,
    %c0_1 = arith.constant 0 : index
    %c384 = arith.constant 384 : index
    %2 = vector.load %arg10[%c0_1, %c384] : memref<8x512xf32, #tpu.memory_space<vmem>>, vector<8x128xf32>
    tpu.vector_store %arg10[%c0_1, %c384], %0 {strides = array<i32>} : memref<8x512xf32, #tpu.memory_space<vmem>>, vector<8x128xf32>,
    %c0_2 = arith.constant 0 : index
    %c0_3 = arith.constant 0 : index
    %c0_4 = arith.constant 0 : index
    %3 = vector.load %arg1[%c0_2, %c0_3, %c0_4] : memref<1x4x64xf32, #tpu.memory_space<vmem>>, vector<1x4x64xf32>
    %4 = vector.shape_cast %3 : vector<1x4x64xf32> to vector<4x64xf32>
    %5 = arith.truncf %4 : vector<4x64xf32> to vector<4x64xbf16>
    %c0_5 = arith.constant 0 : index
    %c0_6 = arith.constant 0 : index
    %6 = vector.load %arg3[%c0_5, %c0_6] : memref<64x256xbf16, #tpu.memory_space<vmem>>, vector<64x256xbf16>
    %cst_7 = arith.constant dense<0.000000e+00> : vector<4x256xf32>
    %7 = tpu.matmul %5, %6, %cst_7 {dimension_numbers = #tpu.dot_dimension_numbers<[1], [0], [0], [1], [0, 0, 1, 1], [], []>} : vector<4x64xbf16>, vector<64x256xbf16>, vector<4x256xf32> -> vector<4x256xf32>
    %c0_8 = arith.constant 0 : index
    %c0_9 = arith.constant 0 : index
    %c0_10 = arith.constant 0 : index
    %8 = vector.load %arg2[%c0_8, %c0_9, %c0_10] : memref<1x4x256xf32, #tpu.memory_space<vmem>>, vector<1x4x256xf32>
    %9 = vector.shape_cast %8 : vector<1x4x256xf32> to vector<4x256xf32>
    %10 = tpu.concatenate %7, %9 in 0 : vector<4x256xf32>, vector<4x256xf32> -> vector<8x256xf32>
    %c0_11 = arith.constant 0 : index
    %c128 = arith.constant 128 : index
    %11 = vector.load %arg10[%c0_11, %c128] : memref<8x512xf32, #tpu.memory_space<vmem>>, vector<8x256xf32>
    tpu.vector_store %arg10[%c0_11, %c128], %10 {strides = array<i32>} : memref<8x512xf32, #tpu.memory_space<vmem>>, vector<8x256xf32>,
    %c0_12 = arith.constant 0 : index
    %c111 = arith.constant 111 : index
    %12 = vector.load %arg10[%c0_12, %c111] : memref<8x512xf32, #tpu.memory_space<vmem>>, vector<8x256xf32>
    %c0_13 = arith.constant 0 : index
    %c0_14 = arith.constant 0 : index
    %c0_15 = arith.constant 0 : index
    %13 = vector.load %arg4[%c0_13, %c0_14, %c0_15] : memref<6x1x256xf32, #tpu.memory_space<vmem>>, vector<1x1x256xf32>
    %14 = vector.shape_cast %13 : vector<1x1x256xf32> to vector<1x256xf32>
    %15 = vector.broadcast %14 : vector<1x256xf32> to vector<8x256xf32>
    %16 = arith.mulf %12, %15 : vector<8x256xf32>
    %17 = arith.truncf %16 : vector<8x256xf32> to vector<8x256xbf16>
    %c0_16 = arith.constant 0 : index
    %c0_17 = arith.constant 0 : index
    %18 = vector.load %arg11[%c0_16, %c0_17] : memref<72x256xbf16, #tpu.memory_space<vmem>>, vector<8x256xbf16>
    tpu.vector_store %arg11[%c0_16, %c0_17], %17 {strides = array<i32>} : memref<72x256xbf16, #tpu.memory_space<vmem>>, vector<8x256xbf16>,
    %c0_18 = arith.constant 0 : index
    %c112 = arith.constant 112 : index
    %19 = vector.load %arg10[%c0_18, %c112] : memref<8x512xf32, #tpu.memory_space<vmem>>, vector<8x256xf32>
    %20 = arith.truncf %19 : vector<8x256xf32> to vector<8x256xbf16>
    %c8 = arith.constant 8 : index
    %c0_19 = arith.constant 0 : index
    %21 = vector.load %arg11[%c8, %c0_19] : memref<72x256xbf16, #tpu.memory_space<vmem>>, vector<8x256xbf16>
    tpu.vector_store %arg11[%c8, %c0_19], %20 {strides = array<i32>} : memref<72x256xbf16, #tpu.memory_space<vmem>>, vector<8x256xbf16>,
    %c0_20 = arith.constant 0 : index
    %c113 = arith.constant 113 : index
    %22 = vector.load %arg10[%c0_20, %c113] : memref<8x512xf32, #tpu.memory_space<vmem>>, vector<8x256xf32>
    %c1 = arith.constant 1 : index
    %c0_21 = arith.constant 0 : index
    %c0_22 = arith.constant 0 : index
    %23 = vector.load %arg4[%c1, %c0_21, %c0_22] : memref<6x1x256xf32, #tpu.memory_space<vmem>>, vector<1x1x256xf32>
    %24 = vector.shape_cast %23 : vector<1x1x256xf32> to vector<1x256xf32>
    %25 = vector.broadcast %24 : vector<1x256xf32> to vector<8x256xf32>
    %26 = arith.mulf %22, %25 : vector<8x256xf32>
    %27 = arith.truncf %26 : vector<8x256xf32> to vector<8x256xbf16>
    %c16 = arith.constant 16 : index
    %c0_23 = arith.constant 0 : index
    %28 = vector.load %arg11[%c16, %c0_23] : memref<72x256xbf16, #tpu.memory_space<vmem>>, vector<8x256xbf16>
    tpu.vector_store %arg11[%c16, %c0_23], %27 {strides = array<i32>} : memref<72x256xbf16, #tpu.memory_space<vmem>>, vector<8x256xbf16>,
    %c0_24 = arith.constant 0 : index
    %c127 = arith.constant 127 : index
    %29 = vector.load %arg10[%c0_24, %c127] : memref<8x512xf32, #tpu.memory_space<vmem>>, vector<8x256xf32>
    %c2 = arith.constant 2 : index
    %c0_25 = arith.constant 0 : index
    %c0_26 = arith.constant 0 : index
    %30 = vector.load %arg4[%c2, %c0_25, %c0_26] : memref<6x1x256xf32, #tpu.memory_space<vmem>>, vector<1x1x256xf32>
    %31 = vector.shape_cast %30 : vector<1x1x256xf32> to vector<1x256xf32>
    %32 = vector.broadcast %31 : vector<1x256xf32> to vector<8x256xf32>
    %33 = arith.mulf %29, %32 : vector<8x256xf32>
    %34 = arith.truncf %33 : vector<8x256xf32> to vector<8x256xbf16>
    %c24 = arith.constant 24 : index
    %c0_27 = arith.constant 0 : index
    %35 = vector.load %arg11[%c24, %c0_27] : memref<72x256xbf16, #tpu.memory_space<vmem>>, vector<8x256xbf16>
    tpu.vector_store %arg11[%c24, %c0_27], %34 {strides = array<i32>} : memref<72x256xbf16, #tpu.memory_space<vmem>>, vector<8x256xbf16>,
    %c0_28 = arith.constant 0 : index
    %c128_29 = arith.constant 128 : index
    %36 = vector.load %arg10[%c0_28, %c128_29] : memref<8x512xf32, #tpu.memory_space<vmem>>, vector<8x256xf32>
    %37 = arith.truncf %36 : vector<8x256xf32> to vector<8x256xbf16>
    %c32 = arith.constant 32 : index
    %c0_30 = arith.constant 0 : index
    %38 = vector.load %arg11[%c32, %c0_30] : memref<72x256xbf16, #tpu.memory_space<vmem>>, vector<8x256xbf16>
    tpu.vector_store %arg11[%c32, %c0_30], %37 {strides = array<i32>} : memref<72x256xbf16, #tpu.memory_space<vmem>>, vector<8x256xbf16>,
    %c0_31 = arith.constant 0 : index
    %c129 = arith.constant 129 : index
    %39 = vector.load %arg10[%c0_31, %c129] : memref<8x512xf32, #tpu.memory_space<vmem>>, vector<8x256xf32>
    %c3 = arith.constant 3 : index
    %c0_32 = arith.constant 0 : index
    %c0_33 = arith.constant 0 : index
    %40 = vector.load %arg4[%c3, %c0_32, %c0_33] : memref<6x1x256xf32, #tpu.memory_space<vmem>>, vector<1x1x256xf32>
    %41 = vector.shape_cast %40 : vector<1x1x256xf32> to vector<1x256xf32>
    %42 = vector.broadcast %41 : vector<1x256xf32> to vector<8x256xf32>
    %43 = arith.mulf %39, %42 : vector<8x256xf32>
    %44 = arith.truncf %43 : vector<8x256xf32> to vector<8x256xbf16>
    %c40 = arith.constant 40 : index
    %c0_34 = arith.constant 0 : index
    %45 = vector.load %arg11[%c40, %c0_34] : memref<72x256xbf16, #tpu.memory_space<vmem>>, vector<8x256xbf16>
    tpu.vector_store %arg11[%c40, %c0_34], %44 {strides = array<i32>} : memref<72x256xbf16, #tpu.memory_space<vmem>>, vector<8x256xbf16>,
    %c0_35 = arith.constant 0 : index
    %c143 = arith.constant 143 : index
    %46 = vector.load %arg10[%c0_35, %c143] : memref<8x512xf32, #tpu.memory_space<vmem>>, vector<8x256xf32>
    %c4 = arith.constant 4 : index
    %c0_36 = arith.constant 0 : index
    %c0_37 = arith.constant 0 : index
    %47 = vector.load %arg4[%c4, %c0_36, %c0_37] : memref<6x1x256xf32, #tpu.memory_space<vmem>>, vector<1x1x256xf32>
    %48 = vector.shape_cast %47 : vector<1x1x256xf32> to vector<1x256xf32>
    %49 = vector.broadcast %48 : vector<1x256xf32> to vector<8x256xf32>
    %50 = arith.mulf %46, %49 : vector<8x256xf32>
    %51 = arith.truncf %50 : vector<8x256xf32> to vector<8x256xbf16>
    %c48 = arith.constant 48 : index
    %c0_38 = arith.constant 0 : index
    %52 = vector.load %arg11[%c48, %c0_38] : memref<72x256xbf16, #tpu.memory_space<vmem>>, vector<8x256xbf16>
    tpu.vector_store %arg11[%c48, %c0_38], %51 {strides = array<i32>} : memref<72x256xbf16, #tpu.memory_space<vmem>>, vector<8x256xbf16>,
    %c0_39 = arith.constant 0 : index
    %c144 = arith.constant 144 : index
    %53 = vector.load %arg10[%c0_39, %c144] : memref<8x512xf32, #tpu.memory_space<vmem>>, vector<8x256xf32>
    %54 = arith.truncf %53 : vector<8x256xf32> to vector<8x256xbf16>
    %c56 = arith.constant 56 : index
    %c0_40 = arith.constant 0 : index
    %55 = vector.load %arg11[%c56, %c0_40] : memref<72x256xbf16, #tpu.memory_space<vmem>>, vector<8x256xbf16>
    tpu.vector_store %arg11[%c56, %c0_40], %54 {strides = array<i32>} : memref<72x256xbf16, #tpu.memory_space<vmem>>, vector<8x256xbf16>,
    %c0_41 = arith.constant 0 : index
    %c145 = arith.constant 145 : index
    %56 = vector.load %arg10[%c0_41, %c145] : memref<8x512xf32, #tpu.memory_space<vmem>>, vector<8x256xf32>
    %c5 = arith.constant 5 : index
    %c0_42 = arith.constant 0 : index
    %c0_43 = arith.constant 0 : index
    %57 = vector.load %arg4[%c5, %c0_42, %c0_43] : memref<6x1x256xf32, #tpu.memory_space<vmem>>, vector<1x1x256xf32>
    %58 = vector.shape_cast %57 : vector<1x1x256xf32> to vector<1x256xf32>
    %59 = vector.broadcast %58 : vector<1x256xf32> to vector<8x256xf32>
    %60 = arith.mulf %56, %59 : vector<8x256xf32>
    %61 = arith.truncf %60 : vector<8x256xf32> to vector<8x256xbf16>
    %c64 = arith.constant 64 : index
    %c0_44 = arith.constant 0 : index
    %62 = vector.load %arg11[%c64, %c0_44] : memref<72x256xbf16, #tpu.memory_space<vmem>>, vector<8x256xbf16>
    tpu.vector_store %arg11[%c64, %c0_44], %61 {strides = array<i32>} : memref<72x256xbf16, #tpu.memory_space<vmem>>, vector<8x256xbf16>,
    %c0_45 = arith.constant 0 : index
    %c0_46 = arith.constant 0 : index
    %63 = vector.load %arg5[%c0_45, %c0_46] : memref<4x72xbf16, #tpu.memory_space<vmem>>, vector<4x72xbf16>
    %c0_47 = arith.constant 0 : index
    %c0_48 = arith.constant 0 : index
    %64 = vector.load %arg11[%c0_47, %c0_48] : memref<72x256xbf16, #tpu.memory_space<vmem>>, vector<72x256xbf16>
    %cst_49 = arith.constant dense<0.000000e+00> : vector<4x256xf32>
    %65 = tpu.matmul %63, %64, %cst_49 {dimension_numbers = #tpu.dot_dimension_numbers<[1], [0], [0], [1], [0, 0, 1, 1], [], []>} : vector<4x72xbf16>, vector<72x256xbf16>, vector<4x256xf32> -> vector<4x256xf32>
    %c0_50 = arith.constant 0 : index
    %c0_51 = arith.constant 0 : index
    %66 = vector.load %arg6[%c0_50, %c0_51] : memref<4x1xf32, #tpu.memory_space<vmem>>, vector<4x1xf32>
    %67 = vector.broadcast %66 : vector<4x1xf32> to vector<4x256xf32>
    %68 = arith.addf %65, %67 : vector<4x256xf32>
    %cst_52 = arith.constant 0.000000e+00 : f32
    %69 = vector.broadcast %cst_52 : f32 to vector<4x256xf32>
    %70 = arith.maximumf %68, %69 : vector<4x256xf32>
    %cst_53 = arith.constant 0.000000e+00 : f32
    %71 = vector.broadcast %cst_53 : f32 to vector<4x256xf32>
    %72 = tpu.concatenate %70, %71 in 0 : vector<4x256xf32>, vector<4x256xf32> -> vector<8x256xf32>
    %c0_54 = arith.constant 0 : index
    %c128_55 = arith.constant 128 : index
    %73 = vector.load %arg10[%c0_54, %c128_55] : memref<8x512xf32, #tpu.memory_space<vmem>>, vector<8x256xf32>
    tpu.vector_store %arg10[%c0_54, %c128_55], %72 {strides = array<i32>} : memref<8x512xf32, #tpu.memory_space<vmem>>, vector<8x256xf32>,
    %c0_56 = arith.constant 0 : index
    %c111_57 = arith.constant 111 : index
    %74 = vector.load %arg10[%c0_56, %c111_57] : memref<8x512xf32, #tpu.memory_space<vmem>>, vector<8x256xf32>
    %c0_58 = arith.constant 0 : index
    %c0_59 = arith.constant 0 : index
    %c0_60 = arith.constant 0 : index
    %75 = vector.load %arg4[%c0_58, %c0_59, %c0_60] : memref<6x1x256xf32, #tpu.memory_space<vmem>>, vector<1x1x256xf32>
    %76 = vector.shape_cast %75 : vector<1x1x256xf32> to vector<1x256xf32>
    %77 = vector.broadcast %76 : vector<1x256xf32> to vector<8x256xf32>
    %78 = arith.mulf %74, %77 : vector<8x256xf32>
    %79 = arith.truncf %78 : vector<8x256xf32> to vector<8x256xbf16>
    %c0_61 = arith.constant 0 : index
    %c0_62 = arith.constant 0 : index
    %80 = vector.load %arg11[%c0_61, %c0_62] : memref<72x256xbf16, #tpu.memory_space<vmem>>, vector<8x256xbf16>
    tpu.vector_store %arg11[%c0_61, %c0_62], %79 {strides = array<i32>} : memref<72x256xbf16, #tpu.memory_space<vmem>>, vector<8x256xbf16>,
    %c0_63 = arith.constant 0 : index
    %c112_64 = arith.constant 112 : index
    %81 = vector.load %arg10[%c0_63, %c112_64] : memref<8x512xf32, #tpu.memory_space<vmem>>, vector<8x256xf32>
    %82 = arith.truncf %81 : vector<8x256xf32> to vector<8x256xbf16>
    %c8_65 = arith.constant 8 : index
    %c0_66 = arith.constant 0 : index
    %83 = vector.load %arg11[%c8_65, %c0_66] : memref<72x256xbf16, #tpu.memory_space<vmem>>, vector<8x256xbf16>
    tpu.vector_store %arg11[%c8_65, %c0_66], %82 {strides = array<i32>} : memref<72x256xbf16, #tpu.memory_space<vmem>>, vector<8x256xbf16>,
    %c0_67 = arith.constant 0 : index
    %c113_68 = arith.constant 113 : index
    %84 = vector.load %arg10[%c0_67, %c113_68] : memref<8x512xf32, #tpu.memory_space<vmem>>, vector<8x256xf32>
    %c1_69 = arith.constant 1 : index
    %c0_70 = arith.constant 0 : index
    %c0_71 = arith.constant 0 : index
    %85 = vector.load %arg4[%c1_69, %c0_70, %c0_71] : memref<6x1x256xf32, #tpu.memory_space<vmem>>, vector<1x1x256xf32>
    %86 = vector.shape_cast %85 : vector<1x1x256xf32> to vector<1x256xf32>
    %87 = vector.broadcast %86 : vector<1x256xf32> to vector<8x256xf32>
    %88 = arith.mulf %84, %87 : vector<8x256xf32>
    %89 = arith.truncf %88 : vector<8x256xf32> to vector<8x256xbf16>
    %c16_72 = arith.constant 16 : index
    %c0_73 = arith.constant 0 : index
    %90 = vector.load %arg11[%c16_72, %c0_73] : memref<72x256xbf16, #tpu.memory_space<vmem>>, vector<8x256xbf16>
    tpu.vector_store %arg11[%c16_72, %c0_73], %89 {strides = array<i32>} : memref<72x256xbf16, #tpu.memory_space<vmem>>, vector<8x256xbf16>,
    %c0_74 = arith.constant 0 : index
    %c127_75 = arith.constant 127 : index
    %91 = vector.load %arg10[%c0_74, %c127_75] : memref<8x512xf32, #tpu.memory_space<vmem>>, vector<8x256xf32>
    %c2_76 = arith.constant 2 : index
    %c0_77 = arith.constant 0 : index
    %c0_78 = arith.constant 0 : index
    %92 = vector.load %arg4[%c2_76, %c0_77, %c0_78] : memref<6x1x256xf32, #tpu.memory_space<vmem>>, vector<1x1x256xf32>
    %93 = vector.shape_cast %92 : vector<1x1x256xf32> to vector<1x256xf32>
    %94 = vector.broadcast %93 : vector<1x256xf32> to vector<8x256xf32>
    %95 = arith.mulf %91, %94 : vector<8x256xf32>
    %96 = arith.truncf %95 : vector<8x256xf32> to vector<8x256xbf16>
    %c24_79 = arith.constant 24 : index
    %c0_80 = arith.constant 0 : index
    %97 = vector.load %arg11[%c24_79, %c0_80] : memref<72x256xbf16, #tpu.memory_space<vmem>>, vector<8x256xbf16>
    tpu.vector_store %arg11[%c24_79, %c0_80], %96 {strides = array<i32>} : memref<72x256xbf16, #tpu.memory_space<vmem>>, vector<8x256xbf16>,
    %c0_81 = arith.constant 0 : index
    %c128_82 = arith.constant 128 : index
    %98 = vector.load %arg10[%c0_81, %c128_82] : memref<8x512xf32, #tpu.memory_space<vmem>>, vector<8x256xf32>
    %99 = arith.truncf %98 : vector<8x256xf32> to vector<8x256xbf16>
    %c32_83 = arith.constant 32 : index
    %c0_84 = arith.constant 0 : index
    %100 = vector.load %arg11[%c32_83, %c0_84] : memref<72x256xbf16, #tpu.memory_space<vmem>>, vector<8x256xbf16>
    tpu.vector_store %arg11[%c32_83, %c0_84], %99 {strides = array<i32>} : memref<72x256xbf16, #tpu.memory_space<vmem>>, vector<8x256xbf16>,
    %c0_85 = arith.constant 0 : index
    %c129_86 = arith.constant 129 : index
    %101 = vector.load %arg10[%c0_85, %c129_86] : memref<8x512xf32, #tpu.memory_space<vmem>>, vector<8x256xf32>
    %c3_87 = arith.constant 3 : index
    %c0_88 = arith.constant 0 : index
    %c0_89 = arith.constant 0 : index
    %102 = vector.load %arg4[%c3_87, %c0_88, %c0_89] : memref<6x1x256xf32, #tpu.memory_space<vmem>>, vector<1x1x256xf32>
    %103 = vector.shape_cast %102 : vector<1x1x256xf32> to vector<1x256xf32>
    %104 = vector.broadcast %103 : vector<1x256xf32> to vector<8x256xf32>
    %105 = arith.mulf %101, %104 : vector<8x256xf32>
    %106 = arith.truncf %105 : vector<8x256xf32> to vector<8x256xbf16>
    %c40_90 = arith.constant 40 : index
    %c0_91 = arith.constant 0 : index
    %107 = vector.load %arg11[%c40_90, %c0_91] : memref<72x256xbf16, #tpu.memory_space<vmem>>, vector<8x256xbf16>
    tpu.vector_store %arg11[%c40_90, %c0_91], %106 {strides = array<i32>} : memref<72x256xbf16, #tpu.memory_space<vmem>>, vector<8x256xbf16>,
    %c0_92 = arith.constant 0 : index
    %c143_93 = arith.constant 143 : index
    %108 = vector.load %arg10[%c0_92, %c143_93] : memref<8x512xf32, #tpu.memory_space<vmem>>, vector<8x256xf32>
    %c4_94 = arith.constant 4 : index
    %c0_95 = arith.constant 0 : index
    %c0_96 = arith.constant 0 : index
    %109 = vector.load %arg4[%c4_94, %c0_95, %c0_96] : memref<6x1x256xf32, #tpu.memory_space<vmem>>, vector<1x1x256xf32>
    %110 = vector.shape_cast %109 : vector<1x1x256xf32> to vector<1x256xf32>
    %111 = vector.broadcast %110 : vector<1x256xf32> to vector<8x256xf32>
    %112 = arith.mulf %108, %111 : vector<8x256xf32>
    %113 = arith.truncf %112 : vector<8x256xf32> to vector<8x256xbf16>
    %c48_97 = arith.constant 48 : index
    %c0_98 = arith.constant 0 : index
    %114 = vector.load %arg11[%c48_97, %c0_98] : memref<72x256xbf16, #tpu.memory_space<vmem>>, vector<8x256xbf16>
    tpu.vector_store %arg11[%c48_97, %c0_98], %113 {strides = array<i32>} : memref<72x256xbf16, #tpu.memory_space<vmem>>, vector<8x256xbf16>,
    %c0_99 = arith.constant 0 : index
    %c144_100 = arith.constant 144 : index
    %115 = vector.load %arg10[%c0_99, %c144_100] : memref<8x512xf32, #tpu.memory_space<vmem>>, vector<8x256xf32>
    %116 = arith.truncf %115 : vector<8x256xf32> to vector<8x256xbf16>
    %c56_101 = arith.constant 56 : index
    %c0_102 = arith.constant 0 : index
    %117 = vector.load %arg11[%c56_101, %c0_102] : memref<72x256xbf16, #tpu.memory_space<vmem>>, vector<8x256xbf16>
    tpu.vector_store %arg11[%c56_101, %c0_102], %116 {strides = array<i32>} : memref<72x256xbf16, #tpu.memory_space<vmem>>, vector<8x256xbf16>,
    %c0_103 = arith.constant 0 : index
    %c145_104 = arith.constant 145 : index
    %118 = vector.load %arg10[%c0_103, %c145_104] : memref<8x512xf32, #tpu.memory_space<vmem>>, vector<8x256xf32>
    %c5_105 = arith.constant 5 : index
    %c0_106 = arith.constant 0 : index
    %c0_107 = arith.constant 0 : index
    %119 = vector.load %arg4[%c5_105, %c0_106, %c0_107] : memref<6x1x256xf32, #tpu.memory_space<vmem>>, vector<1x1x256xf32>
    %120 = vector.shape_cast %119 : vector<1x1x256xf32> to vector<1x256xf32>
    %121 = vector.broadcast %120 : vector<1x256xf32> to vector<8x256xf32>
    %122 = arith.mulf %118, %121 : vector<8x256xf32>
    %123 = arith.truncf %122 : vector<8x256xf32> to vector<8x256xbf16>
    %c64_108 = arith.constant 64 : index
    %c0_109 = arith.constant 0 : index
    %124 = vector.load %arg11[%c64_108, %c0_109] : memref<72x256xbf16, #tpu.memory_space<vmem>>, vector<8x256xbf16>
    tpu.vector_store %arg11[%c64_108, %c0_109], %123 {strides = array<i32>} : memref<72x256xbf16, #tpu.memory_space<vmem>>, vector<8x256xbf16>,
    %c0_110 = arith.constant 0 : index
    %c0_111 = arith.constant 0 : index
    %125 = vector.load %arg7[%c0_110, %c0_111] : memref<8x72xbf16, #tpu.memory_space<vmem>>, vector<8x72xbf16>
    %c0_112 = arith.constant 0 : index
    %c0_113 = arith.constant 0 : index
    %126 = vector.load %arg11[%c0_112, %c0_113] : memref<72x256xbf16, #tpu.memory_space<vmem>>, vector<72x256xbf16>
    %cst_114 = arith.constant dense<0.000000e+00> : vector<8x256xf32>
    %127 = tpu.matmul %125, %126, %cst_114 {dimension_numbers = #tpu.dot_dimension_numbers<[1], [0], [0], [1], [0, 0, 1, 1], [], []>} : vector<8x72xbf16>, vector<72x256xbf16>, vector<8x256xf32> -> vector<8x256xf32>
    %c0_115 = arith.constant 0 : index
    %c0_116 = arith.constant 0 : index
    %128 = vector.load %arg8[%c0_115, %c0_116] : memref<8x1xf32, #tpu.memory_space<vmem>>, vector<8x1xf32>
    %129 = vector.broadcast %128 : vector<8x1xf32> to vector<8x256xf32>
    %130 = arith.addf %127, %129 : vector<8x256xf32>
    %cst_117 = arith.constant 0.000000e+00 : f32
    %131 = vector.broadcast %cst_117 : f32 to vector<8x256xf32>
    %132 = arith.maximumf %130, %131 : vector<8x256xf32>
    %c0_118 = arith.constant 0 : index
    %c0_119 = arith.constant 0 : index
    %c0_120 = arith.constant 0 : index
    %133 = vector.load %arg9[%c0_118, %c0_119, %c0_120] : memref<1x8x256xf32, #tpu.memory_space<vmem>>, vector<1x8x256xf32>
    %134 = vector.shape_cast %133 : vector<1x8x256xf32> to vector<8x256xf32>
    %135 = vector.shape_cast %132 : vector<8x256xf32> to vector<1x8x256xf32>
    tpu.vector_store %arg9[%c0_118, %c0_119, %c0_120], %135 {strides = array<i32>} : memref<1x8x256xf32, #tpu.memory_space<vmem>>, vector<1x8x256xf32>,
    return
  }
  func.func @transform_0(%arg0: i32) -> (i32, i32, i32) {
    %c0_i32 = arith.constant 0 : i32
    %c0_i32_0 = arith.constant 0 : i32
    %c0_i32_1 = arith.constant 0 : i32
    return %arg0, %c0_i32, %c0_i32_0 : i32, i32, i32
  }
  func.func @transform_1(%arg0: i32) -> (i32, i32, i32) {
    %c0_i32 = arith.constant 0 : i32
    %c0_i32_0 = arith.constant 0 : i32
    %c0_i32_1 = arith.constant 0 : i32
    return %arg0, %c0_i32, %c0_i32_0 : i32, i32, i32
  }
  func.func @transform_2(%arg0: i32) -> (i32, i32) {
    %c0_i32 = arith.constant 0 : i32
    %c0_i32_0 = arith.constant 0 : i32
    %c0_i32_1 = arith.constant 0 : i32
    return %c0_i32, %c0_i32_0 : i32, i32
  }
  func.func @transform_3(%arg0: i32) -> (i32, i32, i32) {
    %c0_i32 = arith.constant 0 : i32
    %c0_i32_0 = arith.constant 0 : i32
    %c0_i32_1 = arith.constant 0 : i32
    %c0_i32_2 = arith.constant 0 : i32
    return %c0_i32, %c0_i32_0, %c0_i32_1 : i32, i32, i32
  }
  func.func @transform_4(%arg0: i32) -> (i32, i32) {
    %c0_i32 = arith.constant 0 : i32
    %c0_i32_0 = arith.constant 0 : i32
    %c0_i32_1 = arith.constant 0 : i32
    return %c0_i32, %c0_i32_0 : i32, i32
  }
  func.func @transform_5(%arg0: i32) -> (i32, i32) {
    %c0_i32 = arith.constant 0 : i32
    %c0_i32_0 = arith.constant 0 : i32
    %c0_i32_1 = arith.constant 0 : i32
    return %c0_i32, %c0_i32_0 : i32, i32
  }
  func.func @transform_6(%arg0: i32) -> (i32, i32) {
    %c0_i32 = arith.constant 0 : i32
    %c0_i32_0 = arith.constant 0 : i32
    %c0_i32_1 = arith.constant 0 : i32
    return %c0_i32, %c0_i32_0 : i32, i32
  }
  func.func @transform_7(%arg0: i32) -> (i32, i32) {
    %c0_i32 = arith.constant 0 : i32
    %c0_i32_0 = arith.constant 0 : i32
    %c0_i32_1 = arith.constant 0 : i32
    return %c0_i32, %c0_i32_0 : i32, i32
  }
  func.func @transform_8(%arg0: i32) -> (i32, i32, i32) {
    %c0_i32 = arith.constant 0 : i32
    %c0_i32_0 = arith.constant 0 : i32
    %c0_i32_1 = arith.constant 0 : i32
    return %arg0, %c0_i32, %c0_i32_0 : i32, i32, i32
  }
}

</mosaic_0001>

<llo_original>
// kernel: fn.1
$region0: #{fn.1}
  #allocation0 [shape = 'u32[]', space=smem, size = 0x4, offset = 0x4, fixed_abs, tag = 'smem constant byte address 0x4 - core index']
  #allocation1 [shape = 'u32[144,128]{1,0:T(1,128)}', space=vmem, size = 0x12000, scoped, tag = 'internal scratch']
  #allocation2 [shape = 'f32[8,512]{1,0:T(8,128)}', space=vmem, size = 0x4000, scoped, tag = 'scratch operand']
  #allocation3 [shape = 'bf16[72,256]{1,0:T(8,128)(2,1)}', space=vmem, size = 0x9000, scoped, tag = 'scratch operand']
  %s0 = inlined_call_operand.vmem [shape: f32[2,4,64], index: 0, kind: input, shape index: {}]
  %s1 = inlined_call_operand.vmem [shape: f32[2,4,256], index: 1, kind: input, shape index: {}]
  %s2 = inlined_call_operand.vmem [shape: bf16[64,256], index: 2, kind: input, shape index: {}]
  %s3 = inlined_call_operand.vmem [shape: f32[6,1,256], index: 3, kind: input, shape index: {}]
  %s4 = inlined_call_operand.vmem [shape: bf16[4,72], index: 4, kind: input, shape index: {}]
  %s5 = inlined_call_operand.vmem [shape: f32[4,1], index: 5, kind: input, shape index: {}]
  %s6 = inlined_call_operand.vmem [shape: bf16[8,72], index: 6, kind: input, shape index: {}]
  %s7 = inlined_call_operand.vmem [shape: f32[8,1], index: 7, kind: input, shape index: {}]
  %s8 = inlined_call_operand.vmem [shape: f32[2,8,256], index: 8, kind: output, shape index: {}]
  %s9 = sld [smem:[#allocation0]]
  $region65: #{fn.1} parent=0
    _
  %s11 = ssub.s32 1, %s9
  %s12 = scalar_select 0, %s11, %s9
  loop: start=0, step=1, limit=4
  $region2: #{fn.1} parent=0 // loop_pre_header
    _
  $region3: #{fn.1} parent=0 // loop_header
    %s14 = sphi 0, %s18
    %p15 = scmp.ge.s32.totalorder %s14, 4
    %s24 = sphi 0, %s26
    %s27 = sphi 0, %s24
    %s28 = sphi 0, %s27
    %s44 = sphi 0, %s28
    %s50 = sphi 0, %s52
    %s53 = sphi 0, %s50
    %s54 = sphi 0, %s53
    %s70 = sphi 0, %s54
    %s74 = sphi 0, %s74
    %s76 = sphi 0, %s74
    %s77 = sphi 0, %s76
    %s91 = sphi 0, %s77
    %s95 = sphi 0, %s95
    %s97 = sphi 0, %s95
    %s98 = sphi 0, %s97
    %s112 = sphi 0, %s98
    %s116 = sphi 0, %s116
    %s118 = sphi 0, %s116
    %s119 = sphi 0, %s118
    %s133 = sphi 0, %s119
    %s137 = sphi 0, %s137
    %s139 = sphi 0, %s137
    %s140 = sphi 0, %s139
    %s154 = sphi 0, %s140
    %s158 = sphi 0, %s158
    %s160 = sphi 0, %s158
    %s161 = sphi 0, %s160
    %s175 = sphi 0, %s161
    %s179 = sphi 0, %s179
    %s181 = sphi 0, %s179
    %s182 = sphi 0, %s181
    %s196 = sphi 0, %s182
    %s202 = sphi 0, %s204
    %s205 = sphi 0, %s202
    %s206 = sphi 0, %s205
    %s222 = sphi 0, %s206
  $region4: #{fn.1} parent=0 // loop_header_branch
    %17 = sbr.rel (%p15) target = $region8
  $region5: #{fn.1} parent=0 // loop_body
    %s19 = ssub.s32 %s14, 1
    %s20 = ssub.s32 %s14, 2
    %s21 = sadd.s32 %s14, 1
    %s22 = ssub.s32 %s14, %s21
    %p23 = scmp.eq.s32.totalorder %s22, 0
    %s25 = sadd.s32 %s24, 1
    %s26 = scalar_select %p23, %s24, %s25
    %p29 = pneg %p23
    %p30 = scmp.eq.s32.totalorder %s14, 1
    %p31 = por %p29, %p30
    %p32 = scmp.ne.s32.totalorder %s24, %s27
    %p33 = scmp.eq.s32.totalorder %s14, 0
    %p34 = por %p32, %p33
    %p35 = scmp.ne.s32.totalorder %s24, %s27
    %p36 = scmp.eq.s32.totalorder %s19, 1
    %p37 = por %p35, %p36
    %p38 = scmp.ne.s32.totalorder %s27, %s28
    %p39 = scmp.eq.s32.totalorder %s19, 0
    %p40 = por %p38, %p39
    %p41 = scmp.ne.s32.totalorder %s27, %s28
    %p42 = scmp.eq.s32.totalorder %s20, 1
    %p43 = por %p41, %p42
    %p45 = scmp.ne.s32.totalorder %s28, %s44
    %p46 = scmp.eq.s32.totalorder %s20, 0
    %p47 = por %p45, %p46
    %s48 = ssub.s32 %s14, %s21
    %p49 = scmp.eq.s32.totalorder %s48, 0
    %s51 = sadd.s32 %s50, 1
    %s52 = scalar_select %p49, %s50, %s51
    %p55 = pneg %p49
    %p56 = scmp.eq.s32.totalorder %s14, 1
    %p57 = por %p55, %p56
    %p58 = scmp.ne.s32.totalorder %s50, %s53
    %p59 = scmp.eq.s32.totalorder %s14, 0
    %p60 = por %p58, %p59
    %p61 = scmp.ne.s32.totalorder %s50, %s53
    %p62 = scmp.eq.s32.totalorder %s19, 1
    %p63 = por %p61, %p62
    %p64 = scmp.ne.s32.totalorder %s53, %s54
    %p65 = scmp.eq.s32.totalorder %s19, 0
    %p66 = por %p64, %p65
    %p67 = scmp.ne.s32.totalorder %s53, %s54
    %p68 = scmp.eq.s32.totalorder %s20, 1
    %p69 = por %p67, %p68
    %p71 = scmp.ne.s32.totalorder %s54, %s70
    %p72 = scmp.eq.s32.totalorder %s20, 0
    %p73 = por %p71, %p72
    %s75 = sadd.s32 %s74, 1
    %p78 = scmp.eq.s32.totalorder %s14, 1
    %p79 = scmp.ne.s32.totalorder %s74, %s76
    %p80 = scmp.eq.s32.totalorder %s14, 0
    %p81 = por %p79, %p80
    %p82 = scmp.ne.s32.totalorder %s74, %s76
    %p83 = scmp.eq.s32.totalorder %s19, 1
    %p84 = por %p82, %p83
    %p85 = scmp.ne.s32.totalorder %s76, %s77
    %p86 = scmp.eq.s32.totalorder %s19, 0
    %p87 = por %p85, %p86
    %p88 = scmp.ne.s32.totalorder %s76, %s77
    %p89 = scmp.eq.s32.totalorder %s20, 1
    %p90 = por %p88, %p89
    %p92 = scmp.ne.s32.totalorder %s77, %s91
    %p93 = scmp.eq.s32.totalorder %s20, 0
    %p94 = por %p92, %p93
    %s96 = sadd.s32 %s95, 1
    %p99 = scmp.eq.s32.totalorder %s14, 1
    %p100 = scmp.ne.s32.totalorder %s95, %s97
    %p101 = scmp.eq.s32.totalorder %s14, 0
    %p102 = por %p100, %p101
    %p103 = scmp.ne.s32.totalorder %s95, %s97
    %p104 = scmp.eq.s32.totalorder %s19, 1
    %p105 = por %p103, %p104
    %p106 = scmp.ne.s32.totalorder %s97, %s98
    %p107 = scmp.eq.s32.totalorder %s19, 0
    %p108 = por %p106, %p107
    %p109 = scmp.ne.s32.totalorder %s97, %s98
    %p110 = scmp.eq.s32.totalorder %s20, 1
    %p111 = por %p109, %p110
    %p113 = scmp.ne.s32.totalorder %s98, %s112
    %p114 = scmp.eq.s32.totalorder %s20, 0
    %p115 = por %p113, %p114
    %s117 = sadd.s32 %s116, 1
    %p120 = scmp.eq.s32.totalorder %s14, 1
    %p121 = scmp.ne.s32.totalorder %s116, %s118
    %p122 = scmp.eq.s32.totalorder %s14, 0
    %p123 = por %p121, %p122
    %p124 = scmp.ne.s32.totalorder %s116, %s118
    %p125 = scmp.eq.s32.totalorder %s19, 1
    %p126 = por %p124, %p125
    %p127 = scmp.ne.s32.totalorder %s118, %s119
    %p128 = scmp.eq.s32.totalorder %s19, 0
    %p129 = por %p127, %p128
    %p130 = scmp.ne.s32.totalorder %s118, %s119
    %p131 = scmp.eq.s32.totalorder %s20, 1
    %p132 = por %p130, %p131
    %p134 = scmp.ne.s32.totalorder %s119, %s133
    %p135 = scmp.eq.s32.totalorder %s20, 0
    %p136 = por %p134, %p135
    %s138 = sadd.s32 %s137, 1
    %p141 = scmp.eq.s32.totalorder %s14, 1
    %p142 = scmp.ne.s32.totalorder %s137, %s139
    %p143 = scmp.eq.s32.totalorder %s14, 0
    %p144 = por %p142, %p143
    %p145 = scmp.ne.s32.totalorder %s137, %s139
    %p146 = scmp.eq.s32.totalorder %s19, 1
    %p147 = por %p145, %p146
    %p148 = scmp.ne.s32.totalorder %s139, %s140
    %p149 = scmp.eq.s32.totalorder %s19, 0
    %p150 = por %p148, %p149
    %p151 = scmp.ne.s32.totalorder %s139, %s140
    %p152 = scmp.eq.s32.totalorder %s20, 1
    %p153 = por %p151, %p152
    %p155 = scmp.ne.s32.totalorder %s140, %s154
    %p156 = scmp.eq.s32.totalorder %s20, 0
    %p157 = por %p155, %p156
    %s159 = sadd.s32 %s158, 1
    %p162 = scmp.eq.s32.totalorder %s14, 1
    %p163 = scmp.ne.s32.totalorder %s158, %s160
    %p164 = scmp.eq.s32.totalorder %s14, 0
    %p165 = por %p163, %p164
    %p166 = scmp.ne.s32.totalorder %s158, %s160
    %p167 = scmp.eq.s32.totalorder %s19, 1
    %p168 = por %p166, %p167
    %p169 = scmp.ne.s32.totalorder %s160, %s161
    %p170 = scmp.eq.s32.totalorder %s19, 0
    %p171 = por %p169, %p170
    %p172 = scmp.ne.s32.totalorder %s160, %s161
    %p173 = scmp.eq.s32.totalorder %s20, 1
    %p174 = por %p172, %p173
    %p176 = scmp.ne.s32.totalorder %s161, %s175
    %p177 = scmp.eq.s32.totalorder %s20, 0
    %p178 = por %p176, %p177
    %s180 = sadd.s32 %s179, 1
    %p183 = scmp.eq.s32.totalorder %s14, 1
    %p184 = scmp.ne.s32.totalorder %s179, %s181
    %p185 = scmp.eq.s32.totalorder %s14, 0
    %p186 = por %p184, %p185
    %p187 = scmp.ne.s32.totalorder %s179, %s181
    %p188 = scmp.eq.s32.totalorder %s19, 1
    %p189 = por %p187, %p188
    %p190 = scmp.ne.s32.totalorder %s181, %s182
    %p191 = scmp.eq.s32.totalorder %s19, 0
    %p192 = por %p190, %p191
    %p193 = scmp.ne.s32.totalorder %s181, %s182
    %p194 = scmp.eq.s32.totalorder %s20, 1
    %p195 = por %p193, %p194
    %p197 = scmp.ne.s32.totalorder %s182, %s196
    %p198 = scmp.eq.s32.totalorder %s20, 0
    %p199 = por %p197, %p198
    %s200 = ssub.s32 %s14, %s21
    %p201 = scmp.eq.s32.totalorder %s200, 0
    %s203 = sadd.s32 %s202, 1
    %s204 = scalar_select %p201, %s202, %s203
    %p207 = pneg %p201
    %p208 = scmp.eq.s32.totalorder %s14, 1
    %p209 = por %p207, %p208
    %p210 = scmp.ne.s32.totalorder %s202, %s205
    %p211 = scmp.eq.s32.totalorder %s14, 0
    %p212 = por %p210, %p211
    %p213 = scmp.ne.s32.totalorder %s202, %s205
    %p214 = scmp.eq.s32.totalorder %s19, 1
    %p215 = por %p213, %p214
    %p216 = scmp.ne.s32.totalorder %s205, %s206
    %p217 = scmp.eq.s32.totalorder %s19, 0
    %p218 = por %p216, %p217
    %p219 = scmp.ne.s32.totalorder %s205, %s206
    %p220 = scmp.eq.s32.totalorder %s20, 1
    %p221 = por %p219, %p220
    %p223 = scmp.ne.s32.totalorder %s206, %s222
    %p224 = scmp.eq.s32.totalorder %s20, 0
    %p225 = por %p223, %p224
    %p226 = scmp.le.s32.totalorder 1, %s14
    %p227 = scmp.lt.s32.totalorder %s14, 3
    %p228 = pnand %p226, %p227
    %p229 = pneg %p228
    // Predicated region
    $region9: #{fn.1} parent=5 // pred_check
      _
    $region10: #{fn.1} parent=5 // pred_check_branch
      %231 = sbr.rel (%p228) target = $region12
    $region11: #{fn.1} parent=5 // pred_region
      %s232 = ssub.s32 %s14, 1
      // Predicated region
      $region13: #{fn.1} parent=11 // pred_check
        %p233 = pneg %p87
      $region14: #{fn.1} parent=11 // pred_check_branch
        %235 = sbr.rel (%p233) target = $region16
      $region15: #{fn.1} parent=11 // pred_region
        _
      $region16: #{fn.1} parent=11 // pred_fallthru
        _
      // Predicated region
      $region17: #{fn.1} parent=11 // pred_check
        %p236 = pneg %p108
      $region18: #{fn.1} parent=11 // pred_check_branch
        %238 = sbr.rel (%p236) target = $region20
      $region19: #{fn.1} parent=11 // pred_region
        _
      $region20: #{fn.1} parent=11 // pred_fallthru
        _
      // Predicated region
      $region21: #{fn.1} parent=11 // pred_check
        %p239 = pneg %p129
      $region22: #{fn.1} parent=11 // pred_check_branch
        %241 = sbr.rel (%p239) target = $region24
      $region23: #{fn.1} parent=11 // pred_region
        _
      $region24: #{fn.1} parent=11 // pred_fallthru
        _
      // Predicated region
      $region25: #{fn.1} parent=11 // pred_check
        %p242 = pneg %p150
      $region26: #{fn.1} parent=11 // pred_check_branch
        %244 = sbr.rel (%p242) target = $region28
      $region27: #{fn.1} parent=11 // pred_region
        _
      $region28: #{fn.1} parent=11 // pred_fallthru
        _
      // Predicated region
      $region29: #{fn.1} parent=11 // pred_check
        %p245 = pneg %p171
      $region30: #{fn.1} parent=11 // pred_check_branch
        %247 = sbr.rel (%p245) target = $region32
      $region31: #{fn.1} parent=11 // pred_region
        _
      $region32: #{fn.1} parent=11 // pred_fallthru
        _
      // Predicated region
      $region33: #{fn.1} parent=11 // pred_check
        %p248 = pneg %p192
      $region34: #{fn.1} parent=11 // pred_check_branch
        %250 = sbr.rel (%p248) target = $region36
      $region35: #{fn.1} parent=11 // pred_region
        _
      $region36: #{fn.1} parent=11 // pred_fallthru
        _
    $region12: #{fn.1} parent=5 // pred_fallthru
      _
    %p251 = scmp.lt.s32.totalorder %s14, 2
    // Predicated region
    $region37: #{fn.1} parent=5 // pred_check
      %p252 = pneg %p251
    $region38: #{fn.1} parent=5 // pred_check_branch
      %254 = sbr.rel (%p252) target = $region40
    $region39: #{fn.1} parent=5 // pred_region
      // Predicated region
      $region41: #{fn.1} parent=39 // pred_check
        %p255 = pneg %p34
      $region42: #{fn.1} parent=39 // pred_check_branch
        %257 = sbr.rel (%p255) target = $region44
      $region43: #{fn.1} parent=39 // pred_region
        %p258 = scmp.lt.s32.totalorder %s14, 1
        %s259 = scalar_select %p258, %s14, 1
        %s260 = smul.addr %s259, 4
        %s261 = scalar_lea.vmem %s0, %s260
      $region44: #{fn.1} parent=39 // pred_fallthru
        _
      // Predicated region
      $region45: #{fn.1} parent=39 // pred_check
        %p262 = pneg %p60
      $region46: #{fn.1} parent=39 // pred_check_branch
        %264 = sbr.rel (%p262) target = $region48
      $region47: #{fn.1} parent=39 // pred_region
        %p265 = scmp.lt.s32.totalorder %s14, 1
        %s266 = scalar_select %p265, %s14, 1
        %s267 = smul.addr %s266, 2
        %s268 = smul.addr %s267, 4
        %s269 = scalar_lea.vmem %s1, %s268
      $region48: #{fn.1} parent=39 // pred_fallthru
        _
    $region40: #{fn.1} parent=5 // pred_fallthru
      _
    %p270 = scmp.le.s32.totalorder 1, %s14
    %p271 = scmp.lt.s32.totalorder %s14, 3
    %p272 = pnand %p270, %p271
    %p273 = pneg %p272
    // Predicated region
    $region49: #{fn.1} parent=5 // pred_check
      _
    $region50: #{fn.1} parent=5 // pred_check_branch
      %275 = sbr.rel (%p272) target = $region52
    $region51: #{fn.1} parent=5 // pred_region
      %s276 = ssub.s32 %s14, 1
      %p277 = scmp.lt.s32.totalorder %s19, 1
      %s278 = scalar_select %p277, %s19, 1
      %s279 = smul.addr %s278, 4
      %s280 = scalar_lea.vmem %s0, %s279
      %p281 = pneg %p40
      %p282 = pneg %p37
      %p283 = scmp.lt.s32.totalorder %s19, 1
      %s284 = scalar_select %p283, %s19, 1
      %s285 = smul.addr %s284, 2
      %s286 = smul.addr %s285, 4
      %s287 = scalar_lea.vmem %s1, %s286
      %p288 = pneg %p66
      %p289 = pneg %p63
      %p290 = pneg %p87
      %p291 = pneg %p84
      %p292 = pneg %p108
      %p293 = pneg %p105
      %p294 = pneg %p129
      %p295 = pneg %p126
      %p296 = pneg %p150
      %p297 = pneg %p147
      %p298 = pneg %p171
      %p299 = pneg %p168
      %p300 = pneg %p192
      %p301 = pneg %p189
      %p302 = pneg %p218
      %p303 = pneg %p215
      %p304 = scmp.lt.s32.totalorder %s19, 1
      %s305 = scalar_select %p304, %s19, 1
      %s306 = smul.addr %s305, 2
      %s307 = smul.addr %s306, 8
      %s308 = scalar_lea.vmem %s8, %s307
      %p309 = scmp.lt.s32.totalorder %s19, 1
      %s310 = scalar_select %p309, %s19, 1
      %s311 = smul.addr %s310, 4
      %s312 = scalar_lea.vmem %s0, %s311
      %p313 = scmp.lt.s32.totalorder %s19, 1
      %s314 = scalar_select %p313, %s19, 1
      %s315 = smul.addr %s314, 2
      %s316 = smul.addr %s315, 4
      %s317 = scalar_lea.vmem %s1, %s316
      %p318 = scmp.lt.s32.totalorder %s19, 1
      %s319 = scalar_select %p318, %s19, 1
      %s320 = smul.addr %s319, 2
      %s321 = smul.addr %s320, 8
      %s322 = scalar_lea.vmem %s8, %s321
      %324 = vst [vmem:[#allocation2] sm:$0xff] 0.0
      %325 = vst [vmem:[#allocation2 + $0x18] sm:$0xff] 0.0
      %v326 = vld [vmem:[%s312] sm:$0xf]
      %v327 = vpack.c.bf16 %v326, %v326
      %v328 = vld [vmem:[%s2] sm:$0xff]
      %v329 = vld [vmem:[%s2 + $0x8] sm:$0xff]
      %v330 = vld [vmem:[%s2 + $0x10] sm:$0xff]
      %v331 = vld [vmem:[%s2 + $0x18] sm:$0xff]
      %v332 = vld [vmem:[%s2 + $0x20] sm:$0xff]
      %v333 = vld [vmem:[%s2 + $0x28] sm:$0xff]
      %v334 = vld [vmem:[%s2 + $0x30] sm:$0xff]
      %v335 = vld [vmem:[%s2 + $0x38] sm:$0xff]
      %v344 = vunpack.c.l.b16 %v328
      %v345 = vunpack.c.h.b16 %v328
      %v346 = vunpack.c.l.b16 %v329
      %v347 = vunpack.c.h.b16 %v329
      %v348 = vunpack.c.l.b16 %v330
      %v349 = vunpack.c.h.b16 %v330
      %v350 = vunpack.c.l.b16 %v331
      %v351 = vunpack.c.h.b16 %v331
      %v352 = vunpack.c.l.b16 %v332
      %v353 = vunpack.c.h.b16 %v332
      %v354 = vunpack.c.l.b16 %v333
      %v355 = vunpack.c.h.b16 %v333
      %v356 = vunpack.c.l.b16 %v334
      %v357 = vunpack.c.h.b16 %v334
      %v358 = vunpack.c.l.b16 %v335
      %v359 = vunpack.c.h.b16 %v335
      %v360 = vpack.c.b16 %v346, %v344
      %v361 = vpack.c.b16 %v347, %v345
      %v362 = vpack.c.b16 %v350, %v348
      %v363 = vpack.c.b16 %v351, %v349
      %v364 = vpack.c.b16 %v354, %v352
      %v365 = vpack.c.b16 %v355, %v353
      %v366 = vpack.c.b16 %v358, %v356
      %v367 = vpack.c.b16 %v359, %v357
      %vm376 = vcmask 523264
      %v378 = vsel %vm376, %v327, 0
      %380 = vmatprep.subr.bf16.mxu0 0
      %381 = vmatpush1.bf16.msra.mxu0 0
      %382 = vmatprep.subr.bf16.mxu0 0
      %383 = vmatpush1.bf16.msra.mxu0 0
      %384 = vmatprep.subr.bf16.mxu0 0
      %385 = vmatpush1.bf16.msra.mxu0 0
      %386 = vmatprep.subr.bf16.mxu0 0
      %387 = vmatpush1.bf16.msra.mxu0 0
      %388 = vmatprep.subr.bf16.mxu0 %v367
      %389 = vmatpush1.bf16.msra.mxu0 %v366
      %390 = vmatprep.subr.bf16.mxu0 %v365
      %391 = vmatpush1.bf16.msra.mxu0 %v364
      %392 = vmatprep.subr.bf16.mxu0 %v363
      %393 = vmatpush1.bf16.msra.mxu0 %v362
      %394 = vmatprep.subr.bf16.mxu0 %v361
      %395 = vmatpush1.bf16.msra.mxu0 %v360
      %396 = vmatprep.subr.bf16.mxu0 0
      %397 = vmatpush2.bf16.msra.mxu0 0
      %398 = vmatprep.subr.bf16.mxu0 0
      %399 = vmatpush2.bf16.msra.mxu0 0
      %400 = vmatprep.subr.bf16.mxu0 0
      %401 = vmatpush2.bf16.msra.mxu0 0
      %402 = vmatprep.subr.bf16.mxu0 0
      %403 = vmatpush2.bf16.msra.mxu0 0
      %404 = vmatprep.subr.bf16.mxu0 0
      %405 = vmatpush2.bf16.msra.mxu0 0
      %406 = vmatprep.subr.bf16.mxu0 0
      %407 = vmatpush2.bf16.msra.mxu0 0
      %408 = vmatprep.subr.bf16.mxu0 0
      %409 = vmatpush2.bf16.msra.mxu0 0
      %410 = vmatprep.subr.bf16.mxu0 0
      %411 = vmatpush2.bf16.msra.mxu0 0
      %412 = vmatprep.mubr.bf16.mxu0 0
      %413 = vmatmul.mubr.bf16.gmra.mxu0 %v378
      %v414 = vpop.f32.mrf.mxu0
      %v415 = vadd.f32 0.0, %v414
      %v416 = vpop.f32.mrf.mxu0
      %v417 = vadd.f32 0.0, %v416
      %v418 = vpop.f32.mrf.mxu0
      %v419 = vpop.f32.mrf.mxu0
      %420 = vdwg.mxu0
      %v421 = vld [vmem:[%s317] sm:$0xff]
      %v423 = vcombine.low %v421, %v421
      %vm425 = vcmask 1043456
      %v426 = vsel %vm425, %v415, %v423
      %v427 = vsel %vm425, %v417, %v421
      %428 = vst [vmem:[#allocation2 + $0x8] sm:$0xff] %v426
      %429 = vst [vmem:[#allocation2 + $0x10] sm:$0xff] %v427
      %v430 = vld [vmem:[#allocation2] sm:$0xff]
      %v431 = vld [vmem:[#allocation2 + $0x8] sm:$0xff]
      %v432 = vld [vmem:[#allocation2 + $0x10] sm:$0xff]
      %v433 = vld [vmem:[%s3] sm:$0x3]
      %v435 = vlaneseq
      %v436 = vshrl.u32 %v435, 7
      %v437 = vsub.s32 0, %v436
      %v438 = vrot.slane %v433, %v437
      %v439 = vlaneseq
      %v440 = vshrl.u32 %v439, 7
      %v441 = vsub.s32 1, %v440
      %v442 = vrot.slane %v433, %v441
      %443 = vrot.lane.b32.xlu0 %v438, 111
      %v444 = vpop.permute.xlu0 %443
      %445 = vrot.lane.b32.xlu0 %v442, 111
      %v446 = vpop.permute.xlu0 %445
      %vm447 = vcmask 908288
      %v448 = vsel %vm447, %v444, %v446
      %v452 = vmul.f32 %v430, %v444
      %v453 = vmul.f32 %v431, %v448
      %v454 = vmul.f32 %v432, %v446
      %v455 = vpack.c.bf16 %v452, %v452
      %v456 = vpack.c.bf16 %v453, %v453
      %v457 = vpack.c.bf16 %v454, %v454
      %v461 = vunpack.c.l.b16 %v455
      %v462 = vunpack.c.l.b16 %v456
      %v463 = vunpack.c.l.b16 %v457
      %v464 = vpack.c.b16 %v462, %v461
      %v465 = vpack.c.b16 %v463, %v463
      %466 = vrot.lane.b32.xlu0 %v464, 17
      %v467 = vpop.permute.xlu0 %466
      %468 = vrot.lane.b32.xlu0 %v465, 17
      %v469 = vpop.permute.xlu0 %468
      %v470 = vrot.slane %v467, 4
      %v471 = vrot.slane %v469, 4
      %vm472 = vcmask 1043456
      %v473 = vsel %vm472, %v470, %v471
      %vm474 = vcmask 138240
      %v475 = vsel %vm474, %v467, %v473
      %477 = vst [vmem:[#allocation3] sm:$0xff] %v475
      %v478 = vld [vmem:[#allocation2] sm:$0xff]
      %v479 = vld [vmem:[#allocation2 + $0x8] sm:$0xff]
      %v480 = vld [vmem:[#allocation2 + $0x10] sm:$0xff]
      %v481 = vpack.c.bf16 %v478, %v478
      %v482 = vpack.c.bf16 %v479, %v479
      %v483 = vpack.c.bf16 %v480, %v480
      %v487 = vunpack.c.l.b16 %v481
      %v488 = vunpack.c.l.b16 %v482
      %v489 = vunpack.c.l.b16 %v483
      %v490 = vpack.c.b16 %v488, %v487
      %v491 = vpack.c.b16 %v489, %v489
      %492 = vrot.lane.b32.xlu0 %v490, 16
      %v493 = vpop.permute.xlu0 %492
      %494 = vrot.lane.b32.xlu0 %v491, 16
      %v495 = vpop.permute.xlu0 %494
      %v496 = vrot.slane %v493, 4
      %v497 = vrot.slane %v495, 4
      %v498 = vsel %vm472, %v496, %v497
      %vm499 = vcmask 130048
      %v500 = vsel %vm499, %v493, %v498
      %502 = vst [vmem:[#allocation3 + $0x8] sm:$0xff] %v500
      %v503 = vld [vmem:[#allocation2] sm:$0xff]
      %v504 = vld [vmem:[#allocation2 + $0x8] sm:$0xff]
      %v505 = vld [vmem:[#allocation2 + $0x10] sm:$0xff]
      %s506 = scalar_lea.vmem %s3, 2
      %v507 = vld [vmem:[%s506] sm:$0x3]
      %v509 = vlaneseq
      %v510 = vshrl.u32 %v509, 7
      %v511 = vsub.s32 0, %v510
      %v512 = vrot.slane %v507, %v511
      %v513 = vlaneseq
      %v514 = vshrl.u32 %v513, 7
      %v515 = vsub.s32 1, %v514
      %v516 = vrot.slane %v507, %v515
      %517 = vrot.lane.b32.xlu0 %v512, 113
      %v518 = vpop.permute.xlu0 %517
      %519 = vrot.lane.b32.xlu0 %v516, 113
      %v520 = vpop.permute.xlu0 %519
      %vm521 = vcmask 924672
      %v522 = vsel %vm521, %v518, %v520
      %v526 = vmul.f32 %v503, %v518
      %v527 = vmul.f32 %v504, %v522
      %v528 = vmul.f32 %v505, %v520
      %v529 = vpack.c.bf16 %v526, %v526
      %v530 = vpack.c.bf16 %v527, %v527
      %v531 = vpack.c.bf16 %v528, %v528
      %v535 = vunpack.c.l.b16 %v529
      %v536 = vunpack.c.l.b16 %v530
      %v537 = vunpack.c.l.b16 %v531
      %v538 = vpack.c.b16 %v536, %v535
      %v539 = vpack.c.b16 %v537, %v537
      %540 = vrot.lane.b32.xlu0 %v538, 15
      %v541 = vpop.permute.xlu0 %540
      %542 = vrot.lane.b32.xlu0 %v539, 15
      %v543 = vpop.permute.xlu0 %542
      %v544 = vrot.slane %v541, 4
      %v545 = vrot.slane %v543, 4
      %v546 = vsel %vm472, %v544, %v545
      %vm547 = vcmask 121856
      %v548 = vsel %vm547, %v541, %v546
      %550 = vst [vmem:[#allocation3 + $0x10] sm:$0xff] %v548
      %v551 = vld [vmem:[#allocation2] sm:$0xff]
      %v552 = vld [vmem:[#allocation2 + $0x8] sm:$0xff]
      %v553 = vld [vmem:[#allocation2 + $0x10] sm:$0xff]
      %s554 = scalar_lea.vmem %s3, 4
      %v555 = vld [vmem:[%s554] sm:$0x3]
      %v557 = vlaneseq
      %v558 = vshrl.u32 %v557, 7
      %v559 = vsub.s32 0, %v558
      %v560 = vrot.slane %v555, %v559
      %v561 = vlaneseq
      %v562 = vshrl.u32 %v561, 7
      %v563 = vsub.s32 1, %v562
      %v564 = vrot.slane %v555, %v563
      %565 = vrot.lane.b32.xlu0 %v560, 127
      %v566 = vpop.permute.xlu0 %565
      %567 = vrot.lane.b32.xlu0 %v564, 127
      %v568 = vpop.permute.xlu0 %567
      %vm569 = vcmask 1039360
      %v570 = vsel %vm569, %v566, %v568
      %v574 = vmul.f32 %v551, %v566
      %v575 = vmul.f32 %v552, %v570
      %v576 = vmul.f32 %v553, %v568
      %v577 = vpack.c.bf16 %v574, %v574
      %v578 = vpack.c.bf16 %v575, %v575
      %v579 = vpack.c.bf16 %v576, %v576
      %v583 = vunpack.c.l.b16 %v577
      %v584 = vunpack.c.l.b16 %v578
      %v585 = vunpack.c.l.b16 %v579
      %v586 = vpack.c.b16 %v584, %v583
      %v587 = vpack.c.b16 %v585, %v585
      %588 = vrot.lane.b32.xlu0 %v586, 1
      %v589 = vpop.permute.xlu0 %588
      %590 = vrot.lane.b32.xlu0 %v587, 1
      %v591 = vpop.permute.xlu0 %590
      %v592 = vrot.slane %v589, 4
      %v593 = vrot.slane %v591, 4
      %v594 = vsel %vm472, %v592, %v593
      %vm595 = vcmask 7168
      %v596 = vsel %vm595, %v589, %v594
      %598 = vst [vmem:[#allocation3 + $0x18] sm:$0xff] %v596
      %v599 = vld [vmem:[#allocation2 + $0x8] sm:$0xff]
      %v600 = vld [vmem:[#allocation2 + $0x10] sm:$0xff]
      %v601 = vpack.c.bf16 %v599, %v599
      %v602 = vpack.c.bf16 %v600, %v600
      %v605 = vunpack.c.l.b16 %v601
      %v606 = vunpack.c.l.b16 %v602
      %v607 = vpack.c.b16 %v606, %v605
      %609 = vst [vmem:[#allocation3 + $0x20] sm:$0xff] %v607
      %v610 = vld [vmem:[#allocation2 + $0x8] sm:$0xff]
      %v611 = vld [vmem:[#allocation2 + $0x10] sm:$0xff]
      %v612 = vld [vmem:[#allocation2 + $0x18] sm:$0xff]
      %s613 = scalar_lea.vmem %s3, 6
      %v614 = vld [vmem:[%s613] sm:$0x3]
      %v616 = vlaneseq
      %v617 = vshrl.u32 %v616, 7
      %v618 = vsub.s32 0, %v617
      %v619 = vrot.slane %v614, %v618
      %v620 = vlaneseq
      %v621 = vshrl.u32 %v620, 7
      %v622 = vsub.s32 1, %v621
      %v623 = vrot.slane %v614, %v622
      %624 = vrot.lane.b32.xlu0 %v619, 1
      %v625 = vpop.permute.xlu0 %624
      %626 = vrot.lane.b32.xlu0 %v623, 1
      %v627 = vpop.permute.xlu0 %626
      %vm628 = vcmask 7168
      %v629 = vsel %vm628, %v625, %v627
      %v633 = vmul.f32 %v610, %v625
      %v634 = vmul.f32 %v611, %v629
      %v635 = vmul.f32 %v612, %v627
      %v636 = vpack.c.bf16 %v633, %v633
      %v637 = vpack.c.bf16 %v634, %v634
      %v638 = vpack.c.bf16 %v635, %v635
      %v642 = vunpack.c.l.b16 %v636
      %v643 = vunpack.c.l.b16 %v637
      %v644 = vunpack.c.l.b16 %v638
      %v645 = vpack.c.b16 %v643, %v642
      %v646 = vpack.c.b16 %v644, %v644
      %647 = vrot.lane.b32.xlu0 %v645, 127
      %v648 = vpop.permute.xlu0 %647
      %649 = vrot.lane.b32.xlu0 %v646, 127
      %v650 = vpop.permute.xlu0 %649
      %v651 = vrot.slane %v648, 4
      %v652 = vrot.slane %v650, 4
      %v653 = vsel %vm472, %v651, %v652
      %vm654 = vcmask 1039360
      %v655 = vsel %vm654, %v648, %v653
      %657 = vst [vmem:[#allocation3 + $0x28] sm:$0xff] %v655
      %v658 = vld [vmem:[#allocation2 + $0x8] sm:$0xff]
      %v659 = vld [vmem:[#allocation2 + $0x10] sm:$0xff]
      %v660 = vld [vmem:[#allocation2 + $0x18] sm:$0xff]
      %s661 = scalar_lea.vmem %s3, 8
      %v662 = vld [vmem:[%s661] sm:$0x3]
      %v664 = vlaneseq
      %v665 = vshrl.u32 %v664, 7
      %v666 = vsub.s32 0, %v665
      %v667 = vrot.slane %v662, %v666
      %v668 = vlaneseq
      %v669 = vshrl.u32 %v668, 7
      %v670 = vsub.s32 1, %v669
      %v671 = vrot.slane %v662, %v670
      %672 = vrot.lane.b32.xlu0 %v667, 15
      %v673 = vpop.permute.xlu0 %672
      %674 = vrot.lane.b32.xlu0 %v671, 15
      %v675 = vpop.permute.xlu0 %674
      %vm676 = vcmask 121856
      %v677 = vsel %vm676, %v673, %v675
      %v681 = vmul.f32 %v658, %v673
      %v682 = vmul.f32 %v659, %v677
      %v683 = vmul.f32 %v660, %v675
      %v684 = vpack.c.bf16 %v681, %v681
      %v685 = vpack.c.bf16 %v682, %v682
      %v686 = vpack.c.bf16 %v683, %v683
      %v690 = vunpack.c.l.b16 %v684
      %v691 = vunpack.c.l.b16 %v685
      %v692 = vunpack.c.l.b16 %v686
      %v693 = vpack.c.b16 %v691, %v690
      %v694 = vpack.c.b16 %v692, %v692
      %695 = vrot.lane.b32.xlu0 %v693, 113
      %v696 = vpop.permute.xlu0 %695
      %697 = vrot.lane.b32.xlu0 %v694, 113
      %v698 = vpop.permute.xlu0 %697
      %v699 = vrot.slane %v696, 4
      %v700 = vrot.slane %v698, 4
      %v701 = vsel %vm472, %v699, %v700
      %vm702 = vcmask 924672
      %v703 = vsel %vm702, %v696, %v701
      %705 = vst [vmem:[#allocation3 + $0x30] sm:$0xff] %v703
      %v706 = vld [vmem:[#allocation2 + $0x8] sm:$0xff]
      %v707 = vld [vmem:[#allocation2 + $0x10] sm:$0xff]
      %v708 = vld [vmem:[#allocation2 + $0x18] sm:$0xff]
      %v709 = vpack.c.bf16 %v706, %v706
      %v710 = vpack.c.bf16 %v707, %v707
      %v711 = vpack.c.bf16 %v708, %v708
      %v715 = vunpack.c.l.b16 %v709
      %v716 = vunpack.c.l.b16 %v710
      %v717 = vunpack.c.l.b16 %v711
      %v718 = vpack.c.b16 %v716, %v715
      %v719 = vpack.c.b16 %v717, %v717
      %720 = vrot.lane.b32.xlu0 %v718, 112
      %v721 = vpop.permute.xlu0 %720
      %722 = vrot.lane.b32.xlu0 %v719, 112
      %v723 = vpop.permute.xlu0 %722
      %v724 = vrot.slane %v721, 4
      %v725 = vrot.slane %v723, 4
      %v726 = vsel %vm472, %v724, %v725
      %vm727 = vcmask 916480
      %v728 = vsel %vm727, %v721, %v726
      %730 = vst [vmem:[#allocation3 + $0x38] sm:$0xff] %v728
      %v731 = vld [vmem:[#allocation2 + $0x8] sm:$0xff]
      %v732 = vld [vmem:[#allocation2 + $0x10] sm:$0xff]
      %v733 = vld [vmem:[#allocation2 + $0x18] sm:$0xff]
      %s734 = scalar_lea.vmem %s3, 10
      %v735 = vld [vmem:[%s734] sm:$0x3]
      %v737 = vlaneseq
      %v738 = vshrl.u32 %v737, 7
      %v739 = vsub.s32 0, %v738
      %v740 = vrot.slane %v735, %v739
      %v741 = vlaneseq
      %v742 = vshrl.u32 %v741, 7
      %v743 = vsub.s32 1, %v742
      %v744 = vrot.slane %v735, %v743
      %745 = vrot.lane.b32.xlu0 %v740, 17
      %v746 = vpop.permute.xlu0 %745
      %747 = vrot.lane.b32.xlu0 %v744, 17
      %v748 = vpop.permute.xlu0 %747
      %vm749 = vcmask 138240
      %v750 = vsel %vm749, %v746, %v748
      %v754 = vmul.f32 %v731, %v746
      %v755 = vmul.f32 %v732, %v750
      %v756 = vmul.f32 %v733, %v748
      %v757 = vpack.c.bf16 %v754, %v754
      %v758 = vpack.c.bf16 %v755, %v755
      %v759 = vpack.c.bf16 %v756, %v756
      %v763 = vunpack.c.l.b16 %v757
      %v764 = vunpack.c.l.b16 %v758
      %v765 = vunpack.c.l.b16 %v759
      %v766 = vpack.c.b16 %v764, %v763
      %v767 = vpack.c.b16 %v765, %v765
      %768 = vrot.lane.b32.xlu0 %v766, 111
      %v769 = vpop.permute.xlu0 %768
      %770 = vrot.lane.b32.xlu0 %v767, 111
      %v771 = vpop.permute.xlu0 %770
      %v772 = vrot.slane %v769, 4
      %v773 = vrot.slane %v771, 4
      %v774 = vsel %vm472, %v772, %v773
      %vm775 = vcmask 908288
      %v776 = vsel %vm775, %v769, %v774
      %778 = vst [vmem:[#allocation3 + $0x40] sm:$0xff] %v776
      %v779 = vld [vmem:[%s4] sm:$0x3]
      %v780 = vld [vmem:[#allocation3] sm:$0xff]
      %v781 = vld [vmem:[#allocation3 + $0x8] sm:$0xff]
      %v782 = vld [vmem:[#allocation3 + $0x10] sm:$0xff]
      %v783 = vld [vmem:[#allocation3 + $0x18] sm:$0xff]
      %v784 = vld [vmem:[#allocation3 + $0x20] sm:$0xff]
      %v785 = vld [vmem:[#allocation3 + $0x28] sm:$0xff]
      %v786 = vld [vmem:[#allocation3 + $0x30] sm:$0xff]
      %v787 = vld [vmem:[#allocation3 + $0x38] sm:$0xff]
      %v788 = vld [vmem:[#allocation3 + $0x40] sm:$0xff]
      %v789 = vld [vmem:[%s5] sm:$0xf]
      %791 = vset.pattern.permute.xlu0 0
      %792 = vperm.xlu0 %791, %v789
      %v793 = vpop.permute.xlu0 %792
      %v804 = vunpack.c.l.b16 %v780
      %v805 = vunpack.c.h.b16 %v780
      %v806 = vunpack.c.l.b16 %v781
      %v807 = vunpack.c.h.b16 %v781
      %v808 = vunpack.c.l.b16 %v782
      %v809 = vunpack.c.h.b16 %v782
      %v810 = vunpack.c.l.b16 %v783
      %v811 = vunpack.c.h.b16 %v783
      %v812 = vunpack.c.l.b16 %v784
      %v813 = vunpack.c.h.b16 %v784
      %v814 = vunpack.c.l.b16 %v785
      %v815 = vunpack.c.h.b16 %v785
      %v816 = vunpack.c.l.b16 %v786
      %v817 = vunpack.c.h.b16 %v786
      %v818 = vunpack.c.l.b16 %v787
      %v819 = vunpack.c.h.b16 %v787
      %v820 = vunpack.c.l.b16 %v788
      %v821 = vunpack.c.h.b16 %v788
      %v822 = vpack.c.b16 %v806, %v804
      %v823 = vpack.c.b16 %v807, %v805
      %v824 = vpack.c.b16 %v810, %v808
      %v825 = vpack.c.b16 %v811, %v809
      %v826 = vpack.c.b16 %v814, %v812
      %v827 = vpack.c.b16 %v815, %v813
      %v828 = vpack.c.b16 %v818, %v816
      %v829 = vpack.c.b16 %v819, %v817
      %v830 = vpack.c.b16 %v820, %v820
      %v831 = vpack.c.b16 %v821, %v821
      %vm840 = vcmask 588800
      %v842 = vsel %vm840, %v779, 0
      %v845 = vsel %vm425, %v830, 0
      %v848 = vsel %vm425, %v831, 0
      %850 = vmatprep.subr.bf16.mxu0 0
      %851 = vmatpush1.bf16.msra.mxu0 0
      %852 = vmatprep.subr.bf16.mxu0 0
      %853 = vmatpush1.bf16.msra.mxu0 0
      %854 = vmatprep.subr.bf16.mxu0 0
      %855 = vmatpush1.bf16.msra.mxu0 0
      %856 = vmatprep.subr.bf16.mxu0 %v848
      %857 = vmatpush1.bf16.msra.mxu0 %v845
      %858 = vmatprep.subr.bf16.mxu0 %v829
      %859 = vmatpush1.bf16.msra.mxu0 %v828
      %860 = vmatprep.subr.bf16.mxu0 %v827
      %861 = vmatpush1.bf16.msra.mxu0 %v826
      %862 = vmatprep.subr.bf16.mxu0 %v825
      %863 = vmatpush1.bf16.msra.mxu0 %v824
      %864 = vmatprep.subr.bf16.mxu0 %v823
      %865 = vmatpush1.bf16.msra.mxu0 %v822
      %866 = vmatprep.subr.bf16.mxu0 0
      %867 = vmatpush2.bf16.msra.mxu0 0
      %868 = vmatprep.subr.bf16.mxu0 0
      %869 = vmatpush2.bf16.msra.mxu0 0
      %870 = vmatprep.subr.bf16.mxu0 0
      %871 = vmatpush2.bf16.msra.mxu0 0
      %872 = vmatprep.subr.bf16.mxu0 0
      %873 = vmatpush2.bf16.msra.mxu0 0
      %874 = vmatprep.subr.bf16.mxu0 0
      %875 = vmatpush2.bf16.msra.mxu0 0
      %876 = vmatprep.subr.bf16.mxu0 0
      %877 = vmatpush2.bf16.msra.mxu0 0
      %878 = vmatprep.subr.bf16.mxu0 0
      %879 = vmatpush2.bf16.msra.mxu0 0
      %880 = vmatprep.subr.bf16.mxu0 0
      %881 = vmatpush2.bf16.msra.mxu0 0
      %882 = vmatprep.mubr.bf16.mxu0 0
      %883 = vmatmul.mubr.bf16.gmra.mxu0 %v842
      %v884 = vpop.f32.mrf.mxu0
      %v885 = vadd.f32 %v793, %v884
      %v886 = vpop.f32.mrf.mxu0
      %v887 = vadd.f32 %v793, %v886
      %v888 = vpop.f32.mrf.mxu0
      %v889 = vpop.f32.mrf.mxu0
      %890 = vdwg.mxu0
      %v891 = vmax.f32 %v885, 0.0
      %v892 = vmax.f32 %v887, 0.0
      %v893 = vsel %vm425, %v891, 0.0
      %v894 = vsel %vm425, %v892, 0.0
      %895 = vst [vmem:[#allocation2 + $0x8] sm:$0xff] %v893
      %896 = vst [vmem:[#allocation2 + $0x10] sm:$0xff] %v894
      %v897 = vld [vmem:[#allocation2] sm:$0xff]
      %v898 = vld [vmem:[#allocation2 + $0x8] sm:$0xff]
      %v899 = vld [vmem:[#allocation2 + $0x10] sm:$0xff]
      %v900 = vld [vmem:[%s3] sm:$0x3]
      %v902 = vlaneseq
      %v903 = vshrl.u32 %v902, 7
      %v904 = vsub.s32 0, %v903
      %v905 = vrot.slane %v900, %v904
      %v906 = vlaneseq
      %v907 = vshrl.u32 %v906, 7
      %v908 = vsub.s32 1, %v907
      %v909 = vrot.slane %v900, %v908
      %910 = vrot.lane.b32.xlu0 %v905, 111
      %v911 = vpop.permute.xlu0 %910
      %912 = vrot.lane.b32.xlu0 %v909, 111
      %v913 = vpop.permute.xlu0 %912
      %v914 = vsel %vm447, %v911, %v913
      %v918 = vmul.f32 %v897, %v911
      %v919 = vmul.f32 %v898, %v914
      %v920 = vmul.f32 %v899, %v913
      %v921 = vpack.c.bf16 %v918, %v918
      %v922 = vpack.c.bf16 %v919, %v919
      %v923 = vpack.c.bf16 %v920, %v920
      %v927 = vunpack.c.l.b16 %v921
      %v928 = vunpack.c.l.b16 %v922
      %v929 = vunpack.c.l.b16 %v923
      %v930 = vpack.c.b16 %v928, %v927
      %v931 = vpack.c.b16 %v929, %v929
      %932 = vrot.lane.b32.xlu0 %v930, 17
      %v933 = vpop.permute.xlu0 %932
      %934 = vrot.lane.b32.xlu0 %v931, 17
      %v935 = vpop.permute.xlu0 %934
      %v936 = vrot.slane %v933, 4
      %v937 = vrot.slane %v935, 4
      %v938 = vsel %vm472, %v936, %v937
      %v939 = vsel %vm474, %v933, %v938
      %941 = vst [vmem:[#allocation3] sm:$0xff] %v939
      %v942 = vld [vmem:[#allocation2] sm:$0xff]
      %v943 = vld [vmem:[#allocation2 + $0x8] sm:$0xff]
      %v944 = vld [vmem:[#allocation2 + $0x10] sm:$0xff]
      %v945 = vpack.c.bf16 %v942, %v942
      %v946 = vpack.c.bf16 %v943, %v943
      %v947 = vpack.c.bf16 %v944, %v944
      %v951 = vunpack.c.l.b16 %v945
      %v952 = vunpack.c.l.b16 %v946
      %v953 = vunpack.c.l.b16 %v947
      %v954 = vpack.c.b16 %v952, %v951
      %v955 = vpack.c.b16 %v953, %v953
      %956 = vrot.lane.b32.xlu0 %v954, 16
      %v957 = vpop.permute.xlu0 %956
      %958 = vrot.lane.b32.xlu0 %v955, 16
      %v959 = vpop.permute.xlu0 %958
      %v960 = vrot.slane %v957, 4
      %v961 = vrot.slane %v959, 4
      %v962 = vsel %vm472, %v960, %v961
      %v963 = vsel %vm499, %v957, %v962
      %965 = vst [vmem:[#allocation3 + $0x8] sm:$0xff] %v963
      %v966 = vld [vmem:[#allocation2] sm:$0xff]
      %v967 = vld [vmem:[#allocation2 + $0x8] sm:$0xff]
      %v968 = vld [vmem:[#allocation2 + $0x10] sm:$0xff]
      %v969 = vld [vmem:[%s506] sm:$0x3]
      %v971 = vlaneseq
      %v972 = vshrl.u32 %v971, 7
      %v973 = vsub.s32 0, %v972
      %v974 = vrot.slane %v969, %v973
      %v975 = vlaneseq
      %v976 = vshrl.u32 %v975, 7
      %v977 = vsub.s32 1, %v976
      %v978 = vrot.slane %v969, %v977
      %979 = vrot.lane.b32.xlu0 %v974, 113
      %v980 = vpop.permute.xlu0 %979
      %981 = vrot.lane.b32.xlu0 %v978, 113
      %v982 = vpop.permute.xlu0 %981
      %v983 = vsel %vm521, %v980, %v982
      %v987 = vmul.f32 %v966, %v980
      %v988 = vmul.f32 %v967, %v983
      %v989 = vmul.f32 %v968, %v982
      %v990 = vpack.c.bf16 %v987, %v987
      %v991 = vpack.c.bf16 %v988, %v988
      %v992 = vpack.c.bf16 %v989, %v989
      %v996 = vunpack.c.l.b16 %v990
      %v997 = vunpack.c.l.b16 %v991
      %v998 = vunpack.c.l.b16 %v992
      %v999 = vpack.c.b16 %v997, %v996
      %v1000 = vpack.c.b16 %v998, %v998
      %1001 = vrot.lane.b32.xlu0 %v999, 15
      %v1002 = vpop.permute.xlu0 %1001
      %1003 = vrot.lane.b32.xlu0 %v1000, 15
      %v1004 = vpop.permute.xlu0 %1003
      %v1005 = vrot.slane %v1002, 4
      %v1006 = vrot.slane %v1004, 4
      %v1007 = vsel %vm472, %v1005, %v1006
      %v1008 = vsel %vm547, %v1002, %v1007
      %1010 = vst [vmem:[#allocation3 + $0x10] sm:$0xff] %v1008
      %v1011 = vld [vmem:[#allocation2] sm:$0xff]
      %v1012 = vld [vmem:[#allocation2 + $0x8] sm:$0xff]
      %v1013 = vld [vmem:[#allocation2 + $0x10] sm:$0xff]
      %v1014 = vld [vmem:[%s554] sm:$0x3]
      %v1016 = vlaneseq
      %v1017 = vshrl.u32 %v1016, 7
      %v1018 = vsub.s32 0, %v1017
      %v1019 = vrot.slane %v1014, %v1018
      %v1020 = vlaneseq
      %v1021 = vshrl.u32 %v1020, 7
      %v1022 = vsub.s32 1, %v1021
      %v1023 = vrot.slane %v1014, %v1022
      %1024 = vrot.lane.b32.xlu0 %v1019, 127
      %v1025 = vpop.permute.xlu0 %1024
      %1026 = vrot.lane.b32.xlu0 %v1023, 127
      %v1027 = vpop.permute.xlu0 %1026
      %v1028 = vsel %vm569, %v1025, %v1027
      %v1032 = vmul.f32 %v1011, %v1025
      %v1033 = vmul.f32 %v1012, %v1028
      %v1034 = vmul.f32 %v1013, %v1027
      %v1035 = vpack.c.bf16 %v1032, %v1032
      %v1036 = vpack.c.bf16 %v1033, %v1033
      %v1037 = vpack.c.bf16 %v1034, %v1034
      %v1041 = vunpack.c.l.b16 %v1035
      %v1042 = vunpack.c.l.b16 %v1036
      %v1043 = vunpack.c.l.b16 %v1037
      %v1044 = vpack.c.b16 %v1042, %v1041
      %v1045 = vpack.c.b16 %v1043, %v1043
      %1046 = vrot.lane.b32.xlu0 %v1044, 1
      %v1047 = vpop.permute.xlu0 %1046
      %1048 = vrot.lane.b32.xlu0 %v1045, 1
      %v1049 = vpop.permute.xlu0 %1048
      %v1050 = vrot.slane %v1047, 4
      %v1051 = vrot.slane %v1049, 4
      %v1052 = vsel %vm472, %v1050, %v1051
      %v1053 = vsel %vm595, %v1047, %v1052
      %1055 = vst [vmem:[#allocation3 + $0x18] sm:$0xff] %v1053
      %v1056 = vld [vmem:[#allocation2 + $0x8] sm:$0xff]
      %v1057 = vld [vmem:[#allocation2 + $0x10] sm:$0xff]
      %v1058 = vpack.c.bf16 %v1056, %v1056
      %v1059 = vpack.c.bf16 %v1057, %v1057
      %v1062 = vunpack.c.l.b16 %v1058
      %v1063 = vunpack.c.l.b16 %v1059
      %v1064 = vpack.c.b16 %v1063, %v1062
      %1066 = vst [vmem:[#allocation3 + $0x20] sm:$0xff] %v1064
      %v1067 = vld [vmem:[#allocation2 + $0x8] sm:$0xff]
      %v1068 = vld [vmem:[#allocation2 + $0x10] sm:$0xff]
      %v1069 = vld [vmem:[#allocation2 + $0x18] sm:$0xff]
      %v1070 = vld [vmem:[%s613] sm:$0x3]
      %v1072 = vlaneseq
      %v1073 = vshrl.u32 %v1072, 7
      %v1074 = vsub.s32 0, %v1073
      %v1075 = vrot.slane %v1070, %v1074
      %v1076 = vlaneseq
      %v1077 = vshrl.u32 %v1076, 7
      %v1078 = vsub.s32 1, %v1077
      %v1079 = vrot.slane %v1070, %v1078
      %1080 = vrot.lane.b32.xlu0 %v1075, 1
      %v1081 = vpop.permute.xlu0 %1080
      %1082 = vrot.lane.b32.xlu0 %v1079, 1
      %v1083 = vpop.permute.xlu0 %1082
      %v1084 = vsel %vm628, %v1081, %v1083
      %v1088 = vmul.f32 %v1067, %v1081
      %v1089 = vmul.f32 %v1068, %v1084
      %v1090 = vmul.f32 %v1069, %v1083
      %v1091 = vpack.c.bf16 %v1088, %v1088
      %v1092 = vpack.c.bf16 %v1089, %v1089
      %v1093 = vpack.c.bf16 %v1090, %v1090
      %v1097 = vunpack.c.l.b16 %v1091
      %v1098 = vunpack.c.l.b16 %v1092
      %v1099 = vunpack.c.l.b16 %v1093
      %v1100 = vpack.c.b16 %v1098, %v1097
      %v1101 = vpack.c.b16 %v1099, %v1099
      %1102 = vrot.lane.b32.xlu0 %v1100, 127
      %v1103 = vpop.permute.xlu0 %1102
      %1104 = vrot.lane.b32.xlu0 %v1101, 127
      %v1105 = vpop.permute.xlu0 %1104
      %v1106 = vrot.slane %v1103, 4
      %v1107 = vrot.slane %v1105, 4
      %v1108 = vsel %vm472, %v1106, %v1107
      %v1109 = vsel %vm654, %v1103, %v1108
      %1111 = vst [vmem:[#allocation3 + $0x28] sm:$0xff] %v1109
      %v1112 = vld [vmem:[#allocation2 + $0x8] sm:$0xff]
      %v1113 = vld [vmem:[#allocation2 + $0x10] sm:$0xff]
      %v1114 = vld [vmem:[#allocation2 + $0x18] sm:$0xff]
      %v1115 = vld [vmem:[%s661] sm:$0x3]
      %v1117 = vlaneseq
      %v1118 = vshrl.u32 %v1117, 7
      %v1119 = vsub.s32 0, %v1118
      %v1120 = vrot.slane %v1115, %v1119
      %v1121 = vlaneseq
      %v1122 = vshrl.u32 %v1121, 7
      %v1123 = vsub.s32 1, %v1122
      %v1124 = vrot.slane %v1115, %v1123
      %1125 = vrot.lane.b32.xlu0 %v1120, 15
      %v1126 = vpop.permute.xlu0 %1125
      %1127 = vrot.lane.b32.xlu0 %v1124, 15
      %v1128 = vpop.permute.xlu0 %1127
      %v1129 = vsel %vm676, %v1126, %v1128
      %v1133 = vmul.f32 %v1112, %v1126
      %v1134 = vmul.f32 %v1113, %v1129
      %v1135 = vmul.f32 %v1114, %v1128
      %v1136 = vpack.c.bf16 %v1133, %v1133
      %v1137 = vpack.c.bf16 %v1134, %v1134
      %v1138 = vpack.c.bf16 %v1135, %v1135
      %v1142 = vunpack.c.l.b16 %v1136
      %v1143 = vunpack.c.l.b16 %v1137
      %v1144 = vunpack.c.l.b16 %v1138
      %v1145 = vpack.c.b16 %v1143, %v1142
      %v1146 = vpack.c.b16 %v1144, %v1144
      %1147 = vrot.lane.b32.xlu0 %v1145, 113
      %v1148 = vpop.permute.xlu0 %1147
      %1149 = vrot.lane.b32.xlu0 %v1146, 113
      %v1150 = vpop.permute.xlu0 %1149
      %v1151 = vrot.slane %v1148, 4
      %v1152 = vrot.slane %v1150, 4
      %v1153 = vsel %vm472, %v1151, %v1152
      %v1154 = vsel %vm702, %v1148, %v1153
      %1156 = vst [vmem:[#allocation3 + $0x30] sm:$0xff] %v1154
      %v1157 = vld [vmem:[#allocation2 + $0x8] sm:$0xff]
      %v1158 = vld [vmem:[#allocation2 + $0x10] sm:$0xff]
      %v1159 = vld [vmem:[#allocation2 + $0x18] sm:$0xff]
      %v1160 = vpack.c.bf16 %v1157, %v1157
      %v1161 = vpack.c.bf16 %v1158, %v1158
      %v1162 = vpack.c.bf16 %v1159, %v1159
      %v1166 = vunpack.c.l.b16 %v1160
      %v1167 = vunpack.c.l.b16 %v1161
      %v1168 = vunpack.c.l.b16 %v1162
      %v1169 = vpack.c.b16 %v1167, %v1166
      %v1170 = vpack.c.b16 %v1168, %v1168
      %1171 = vrot.lane.b32.xlu0 %v1169, 112
      %v1172 = vpop.permute.xlu0 %1171
      %1173 = vrot.lane.b32.xlu0 %v1170, 112
      %v1174 = vpop.permute.xlu0 %1173
      %v1175 = vrot.slane %v1172, 4
      %v1176 = vrot.slane %v1174, 4
      %v1177 = vsel %vm472, %v1175, %v1176
      %v1178 = vsel %vm727, %v1172, %v1177
      %1180 = vst [vmem:[#allocation3 + $0x38] sm:$0xff] %v1178
      %v1181 = vld [vmem:[#allocation2 + $0x8] sm:$0xff]
      %v1182 = vld [vmem:[#allocation2 + $0x10] sm:$0xff]
      %v1183 = vld [vmem:[#allocation2 + $0x18] sm:$0xff]
      %v1184 = vld [vmem:[%s734] sm:$0x3]
      %v1186 = vlaneseq
      %v1187 = vshrl.u32 %v1186, 7
      %v1188 = vsub.s32 0, %v1187
      %v1189 = vrot.slane %v1184, %v1188
      %v1190 = vlaneseq
      %v1191 = vshrl.u32 %v1190, 7
      %v1192 = vsub.s32 1, %v1191
      %v1193 = vrot.slane %v1184, %v1192
      %1194 = vrot.lane.b32.xlu0 %v1189, 17
      %v1195 = vpop.permute.xlu0 %1194
      %1196 = vrot.lane.b32.xlu0 %v1193, 17
      %v1197 = vpop.permute.xlu0 %1196
      %v1198 = vsel %vm749, %v1195, %v1197
      %v1202 = vmul.f32 %v1181, %v1195
      %v1203 = vmul.f32 %v1182, %v1198
      %v1204 = vmul.f32 %v1183, %v1197
      %v1205 = vpack.c.bf16 %v1202, %v1202
      %v1206 = vpack.c.bf16 %v1203, %v1203
      %v1207 = vpack.c.bf16 %v1204, %v1204
      %v1211 = vunpack.c.l.b16 %v1205
      %v1212 = vunpack.c.l.b16 %v1206
      %v1213 = vunpack.c.l.b16 %v1207
      %v1214 = vpack.c.b16 %v1212, %v1211
      %v1215 = vpack.c.b16 %v1213, %v1213
      %1216 = vrot.lane.b32.xlu0 %v1214, 111
      %v1217 = vpop.permute.xlu0 %1216
      %1218 = vrot.lane.b32.xlu0 %v1215, 111
      %v1219 = vpop.permute.xlu0 %1218
      %v1220 = vrot.slane %v1217, 4
      %v1221 = vrot.slane %v1219, 4
      %v1222 = vsel %vm472, %v1220, %v1221
      %v1223 = vsel %vm775, %v1217, %v1222
      %1225 = vst [vmem:[#allocation3 + $0x40] sm:$0xff] %v1223
      %v1226 = vld [vmem:[%s6] sm:$0xf]
      %v1227 = vld [vmem:[#allocation3] sm:$0xff]
      %v1228 = vld [vmem:[#allocation3 + $0x8] sm:$0xff]
      %v1229 = vld [vmem:[#allocation3 + $0x10] sm:$0xff]
      %v1230 = vld [vmem:[#allocation3 + $0x18] sm:$0xff]
      %v1231 = vld [vmem:[#allocation3 + $0x20] sm:$0xff]
      %v1232 = vld [vmem:[#allocation3 + $0x28] sm:$0xff]
      %v1233 = vld [vmem:[#allocation3 + $0x30] sm:$0xff]
      %v1234 = vld [vmem:[#allocation3 + $0x38] sm:$0xff]
      %v1235 = vld [vmem:[#allocation3 + $0x40] sm:$0xff]
      %v1236 = vld [vmem:[%s7] sm:$0xff]
      %1238 = vset.pattern.permute.xlu0 0
      %1239 = vperm.xlu0 %1238, %v1236
      %v1240 = vpop.permute.xlu0 %1239
      %v1251 = vunpack.c.l.b16 %v1227
      %v1252 = vunpack.c.h.b16 %v1227
      %v1253 = vunpack.c.l.b16 %v1228
      %v1254 = vunpack.c.h.b16 %v1228
      %v1255 = vunpack.c.l.b16 %v1229
      %v1256 = vunpack.c.h.b16 %v1229
      %v1257 = vunpack.c.l.b16 %v1230
      %v1258 = vunpack.c.h.b16 %v1230
      %v1259 = vunpack.c.l.b16 %v1231
      %v1260 = vunpack.c.h.b16 %v1231
      %v1261 = vunpack.c.l.b16 %v1232
      %v1262 = vunpack.c.h.b16 %v1232
      %v1263 = vunpack.c.l.b16 %v1233
      %v1264 = vunpack.c.h.b16 %v1233
      %v1265 = vunpack.c.l.b16 %v1234
      %v1266 = vunpack.c.h.b16 %v1234
      %v1267 = vunpack.c.l.b16 %v1235
      %v1268 = vunpack.c.h.b16 %v1235
      %v1269 = vpack.c.b16 %v1253, %v1251
      %v1270 = vpack.c.b16 %v1254, %v1252
      %v1271 = vpack.c.b16 %v1257, %v1255
      %v1272 = vpack.c.b16 %v1258, %v1256
      %v1273 = vpack.c.b16 %v1261, %v1259
      %v1274 = vpack.c.b16 %v1262, %v1260
      %v1275 = vpack.c.b16 %v1265, %v1263
      %v1276 = vpack.c.b16 %v1266, %v1264
      %v1277 = vpack.c.b16 %v1267, %v1267
      %v1278 = vpack.c.b16 %v1268, %v1268
      %v1288 = vsel %vm840, %v1226, 0
      %v1291 = vsel %vm425, %v1277, 0
      %v1294 = vsel %vm425, %v1278, 0
      %1296 = vmatprep.subr.bf16.mxu0 0
      %1297 = vmatpush1.bf16.msra.mxu0 0
      %1298 = vmatprep.subr.bf16.mxu0 0
      %1299 = vmatpush1.bf16.msra.mxu0 0
      %1300 = vmatprep.subr.bf16.mxu0 0
      %1301 = vmatpush1.bf16.msra.mxu0 0
      %1302 = vmatprep.subr.bf16.mxu0 %v1294
      %1303 = vmatpush1.bf16.msra.mxu0 %v1291
      %1304 = vmatprep.subr.bf16.mxu0 %v1276
      %1305 = vmatpush1.bf16.msra.mxu0 %v1275
      %1306 = vmatprep.subr.bf16.mxu0 %v1274
      %1307 = vmatpush1.bf16.msra.mxu0 %v1273
      %1308 = vmatprep.subr.bf16.mxu0 %v1272
      %1309 = vmatpush1.bf16.msra.mxu0 %v1271
      %1310 = vmatprep.subr.bf16.mxu0 %v1270
      %1311 = vmatpush1.bf16.msra.mxu0 %v1269
      %1312 = vmatprep.subr.bf16.mxu0 0
      %1313 = vmatpush2.bf16.msra.mxu0 0
      %1314 = vmatprep.subr.bf16.mxu0 0
      %1315 = vmatpush2.bf16.msra.mxu0 0
      %1316 = vmatprep.subr.bf16.mxu0 0
      %1317 = vmatpush2.bf16.msra.mxu0 0
      %1318 = vmatprep.subr.bf16.mxu0 0
      %1319 = vmatpush2.bf16.msra.mxu0 0
      %1320 = vmatprep.subr.bf16.mxu0 0
      %1321 = vmatpush2.bf16.msra.mxu0 0
      %1322 = vmatprep.subr.bf16.mxu0 0
      %1323 = vmatpush2.bf16.msra.mxu0 0
      %1324 = vmatprep.subr.bf16.mxu0 0
      %1325 = vmatpush2.bf16.msra.mxu0 0
      %1326 = vmatprep.subr.bf16.mxu0 0
      %1327 = vmatpush2.bf16.msra.mxu0 0
      %1328 = vmatprep.mubr.bf16.mxu0 0
      %1329 = vmatmul.mubr.bf16.gmra.mxu0 %v1288
      %v1330 = vpop.f32.mrf.mxu0
      %v1331 = vadd.f32 %v1240, %v1330
      %v1332 = vpop.f32.mrf.mxu0
      %v1333 = vadd.f32 %v1240, %v1332
      %v1334 = vpop.f32.mrf.mxu0
      %v1335 = vpop.f32.mrf.mxu0
      %1336 = vdwg.mxu0
      %v1337 = vmax.f32 %v1331, 0.0
      %v1338 = vmax.f32 %v1333, 0.0
      %1339 = vst [vmem:[%s322] sm:$0xff] %v1337
      %1340 = vst [vmem:[%s322 + $0x8] sm:$0xff] %v1338
      %p1341 = scmp.lt.s32.totalorder %s19, 1
      %s1342 = scalar_select %p1341, %s19, 1
      %s1343 = smul.addr %s1342, 2
      %s1344 = smul.addr %s1343, 8
      %s1345 = scalar_lea.vmem %s8, %s1344
      // Predicated region
      $region53: #{fn.1} parent=51 // pred_check
        %p1346 = pneg %p215
      $region54: #{fn.1} parent=51 // pred_check_branch
        %1348 = sbr.rel (%p1346) target = $region56
      $region55: #{fn.1} parent=51 // pred_region
        _
      $region56: #{fn.1} parent=51 // pred_fallthru
        _
    $region52: #{fn.1} parent=5 // pred_fallthru
      _
    %p1349 = scmp.le.s32.totalorder 2, %s14
    // Predicated region
    $region57: #{fn.1} parent=5 // pred_check
      %p1350 = pneg %p1349
    $region58: #{fn.1} parent=5 // pred_check_branch
      %1352 = sbr.rel (%p1350) target = $region60
    $region59: #{fn.1} parent=5 // pred_region
      %s1353 = ssub.s32 %s14, 2
      // Predicated region
      $region61: #{fn.1} parent=59 // pred_check
        %p1354 = pneg %p221
      $region62: #{fn.1} parent=59 // pred_check_branch
        %1356 = sbr.rel (%p1354) target = $region64
      $region63: #{fn.1} parent=59 // pred_region
        %p1357 = scmp.lt.s32.totalorder %s20, 1
        %s1358 = scalar_select %p1357, %s20, 1
        %s1359 = smul.addr %s1358, 2
        %s1360 = smul.addr %s1359, 8
        %s1361 = scalar_lea.vmem %s8, %s1360
      $region64: #{fn.1} parent=59 // pred_fallthru
        _
    $region60: #{fn.1} parent=5 // pred_fallthru
      _
  $region6: #{fn.1} parent=0 // loop_footer
    %s18 = sadd.s32 1, %s14
  $region7: #{fn.1} parent=0 // loop_footer_branch
    %13 = sbr.rel target = $region3
  $region8: #{fn.1} parent=0 // loop_exit
    _

</llo_original>
